<compile_context>
chip_gen: v5e
topology: v5e:2x2
jax: 0.10.0
libtpu: 0.0.40
codegen_flags: <defaults>
</compile_context>

<pallas_src>
import jax
import jax.numpy as jnp
from jax.experimental import pallas as pl
from jax.experimental.pallas import tpu as pltpu

_HIGHEST = jax.lax.Precision.HIGHEST
_VMEM_LIMIT = 48 * 1024 * 1024


def _round_up(n, m):
    return ((n + m - 1) // m) * m


# ---------------------------------------------------------------------------
# Lane-dense path: x viewed as (B, S*D); hidden activations packed to S*H lanes
# via a block-diagonal W1, so every streamed buffer and every vreg is dense.
# ---------------------------------------------------------------------------
def _lane_dense_kernel(x_ref, w1bd_ref, b1t_ref, w2bd_ref, expand_ref, o_ref):
    x = x_ref[...]                                              # (BT, S*D)

    # hidden = tanh(x @ block_diag(W1) + tile(b1)): one lane-dense MXU matmul.
    h = jnp.tanh(
        jnp.dot(x, w1bd_ref[...], preferred_element_type=jnp.float32,
                precision=_HIGHEST)
        + b1t_ref[...]
    )                                                           # (BT, S*H)

    # scores = hidden @ block_diag(w2).  b2 omitted: softmax(s+c) == softmax(s).
    s = jnp.dot(h, w2bd_ref[...], preferred_element_type=jnp.float32,
                precision=_HIGHEST)                             # (BT, S)

    # softmax over the seq axis (the lane axis here).
    m = jnp.max(s, axis=-1, keepdims=True)                      # (BT, 1)
    e = jnp.exp(s - m)                                          # (BT, S)
    denom = jnp.sum(e, axis=-1, keepdims=True)                  # (BT, 1)
    inv = pl.reciprocal(denom, approx=True)                     # EUP slot
    inv = inv * (2.0 - denom * inv)                             # Newton -> ~f32 exact
    attn = e * inv                                              # (BT, S)

    # Broadcast attn[b, s] across the D features of position s with a 0/1
    # expansion matmul (exact under HIGHEST precision), keeping lanes dense.
    attn_full = jnp.dot(attn, expand_ref[...],
                        preferred_element_type=jnp.float32,
                        precision=_HIGHEST)                     # (BT, S*D)

    o_ref[...] = (x * attn_full).astype(o_ref.dtype)


def _pick_bt_lane_dense(B, S, D, itemsize, target_block_bytes=8 << 20):
    row_bytes = max(1, S * D * itemsize)        # lane-dense: no minor-dim padding
    budget = max(1, min(B, target_block_bytes // row_bytes))

    def legal(bt):
        # (BT, S*D) block: last dim == full dim (always legal); second-minor
        # dim must be a multiple of 8 or equal the full batch dim.
        return B % bt == 0 and (bt % 8 == 0 or bt == B)

    # Prefer >= 2 grid steps (v7x has 2 TensorCores; also enables pipelining).
    for cap in (max(1, B // 2), B):
        for bt in range(min(budget, cap), 0, -1):
            if legal(bt):
                return bt
    return B


def _additive_attention_lane_dense(x, w1, b1, w2):
    B, S, D = x.shape
    H = w1.shape[1]
    SD, SH = S * D, S * H

    eye = jnp.eye(S, dtype=w1.dtype)
    w1bd = jnp.kron(eye, w1)                                # (S*D, S*H) block diag
    b1t = jnp.tile(b1.reshape(1, H), (1, S))                # (1, S*H)
    w2bd = jnp.kron(eye, w2)                                # (S*H, S)
    expand = jnp.kron(eye, jnp.ones((1, D), w1.dtype))      # (S, S*D) 0/1 broadcast

    BT = _pick_bt_lane_dense(B, S, D, x.dtype.itemsize)
    num_blocks = B // BT

    x2d = x.reshape(B, SD)                                  # free on contiguous HBM

    x_spec_kwargs = {}
    if num_blocks >= 4:
        # Deeper input prefetch only when a pipeline actually exists; with the
        # 8 MiB block cap, 3x input + 2x output + weights stays under 48 MiB.
        x_spec_kwargs["pipeline_mode"] = pl.Buffered(3)

    cost = pl.CostEstimate(
        flops=2 * B * S * (D * H + H + D),
        transcendentals=B * S * (H + 1),
        bytes_accessed=2 * B * SD * x.dtype.itemsize
        + (SD * SH + SH + SH * S + S * SD) * w1.dtype.itemsize,
    )

    out2d = pl.pallas_call(
        _lane_dense_kernel,
        out_shape=jax.ShapeDtypeStruct((B, SD), x.dtype),
        grid_spec=pltpu.PrefetchScalarGridSpec(
            num_scalar_prefetch=0,
            grid=(num_blocks,),
            in_specs=[
                pl.BlockSpec((BT, SD), lambda i: (i, 0), **x_spec_kwargs),
                pl.BlockSpec((SD, SH), lambda i: (0, 0)),   # resident weights
                pl.BlockSpec((1, SH), lambda i: (0, 0)),
                pl.BlockSpec((SH, S), lambda i: (0, 0)),
                pl.BlockSpec((S, SD), lambda i: (0, 0)),
            ],
            out_specs=pl.BlockSpec((BT, SD), lambda i: (i, 0)),
        ),
        compiler_params=pltpu.CompilerParams(
            dimension_semantics=("parallel",),
            vmem_limit_bytes=_VMEM_LIMIT,
        ),
        cost_estimate=cost,
    )(x2d, w1bd, b1t, w2bd, expand)

    return out2d.reshape(B, S, D)


# ---------------------------------------------------------------------------
# General fallback path: 3-D (BT, S, D) blocks (always a legal block shape).
# ---------------------------------------------------------------------------
def _general_kernel(x_ref, w1_ref, b1_ref, w2_ref, o_ref):
    x = x_ref[...]                                              # (BT, S, D)
    bt, seq, d = x.shape
    x2 = x.reshape(bt * seq, d)
    h = jnp.tanh(
        jnp.dot(x2, w1_ref[...], preferred_element_type=jnp.float32,
                precision=_HIGHEST)
        + b1_ref[...]
    )                                                           # (BT*S, H)
    # Second linear has N=1 -> VPU multiply + lane reduction; MXU stays free.
    s = jnp.sum(h * w2_ref[...], axis=-1, keepdims=True)        # (BT*S, 1)
    s3 = s.reshape(bt, seq, 1)
    m = jnp.max(s3, axis=1, keepdims=True)
    e = jnp.exp(s3 - m)
    attn = e / jnp.sum(e, axis=1, keepdims=True)                # (BT, S, 1)
    o_ref[...] = (x * attn).astype(o_ref.dtype)


def _pick_bt_general(B, S, D, itemsize, target_block_bytes=8 << 20):
    # Budget with the padded VMEM layout: D pads to 128 lanes, S to 8 sublanes.
    padded_row = _round_up(S, 8) * _round_up(D, 128) * max(1, itemsize)
    budget = max(1, min(B, target_block_bytes // padded_row))
    for cap in (max(1, B // 2), B):
        for bt in range(min(budget, cap), 0, -1):
            if B % bt == 0:
                return bt
    return 1


def _additive_attention_general(x, w1, b1, w2):
    B, S, D = x.shape
    H = w1.shape[1]

    BT = _pick_bt_general(B, S, D, x.dtype.itemsize)
    num_blocks = B // BT

    x_spec_kwargs = {}
    if num_blocks >= 4:
        x_spec_kwargs["pipeline_mode"] = pl.Buffered(3)

    cost = pl.CostEstimate(
        flops=2 * B * S * (D * H + H + D),
        transcendentals=B * S * (H + 1),
        bytes_accessed=2 * B * S * D * x.dtype.itemsize
        + (D * H + 2 * H) * w1.dtype.itemsize,
    )

    return pl.pallas_call(
        _general_kernel,
        out_shape=jax.ShapeDtypeStruct((B, S, D), x.dtype),
        grid_spec=pltpu.PrefetchScalarGridSpec(
            num_scalar_prefetch=0,
            grid=(num_blocks,),
            in_specs=[
                pl.BlockSpec((BT, S, D), lambda i: (i, 0, 0), **x_spec_kwargs),
                pl.BlockSpec((D, H), lambda i: (0, 0)),
                pl.BlockSpec((1, H), lambda i: (0, 0)),
                pl.BlockSpec((1, H), lambda i: (0, 0)),
            ],
            out_specs=pl.BlockSpec((BT, S, D), lambda i: (i, 0, 0)),
        ),
        compiler_params=pltpu.CompilerParams(
            dimension_semantics=("parallel",),
            vmem_limit_bytes=_VMEM_LIMIT,
        ),
        cost_estimate=cost,
    )(x, w1, b1.reshape(1, H), w2.reshape(1, H))


def additive_attention(x, w1, b1, w2, b2=None):
    """x: (B, S, D); w1: (D, H); b1: (H,); w2: (H, 1); b2: (1,).

    b2 is accepted for API parity with the PyTorch module but unused inside the
    kernel: softmax over the seq axis is shift-invariant, so a scalar bias
    before it cancels exactly.
    """
    del b2
    B, S, D = x.shape
    H = w1.shape[1]
    blockdiag_bytes = (S * D) * (S * H) * w1.dtype.itemsize
    if (S * D) % 128 == 0 and blockdiag_bytes <= (4 << 20):
        return _additive_attention_lane_dense(x, w1, b1, w2)
    return _additive_attention_general(x, w1, b1, w2)


def _reference(x, w1, b1, w2, b2):
    h = jnp.tanh(jnp.einsum("bsd,dh->bsh", x, w1, precision=_HIGHEST) + b1)
    s = jnp.einsum("bsh,ho->bso", h, w2, precision=_HIGHEST) + b2
    attn = jax.nn.softmax(s, axis=-2)                 # softmax over seq
    return x * attn


if __name__ == "__main__":
    key = jax.random.PRNGKey(0)

    def make_case(k, B, S, D, H):
        kx, kw1, kb1, kw2, kb2 = jax.random.split(k, 5)
        x = jax.random.normal(kx, (B, S, D), dtype=jnp.float32)
        lim1 = 1.0 / (D ** 0.5)
        lim2 = 1.0 / (H ** 0.5)
        w1 = jax.random.uniform(kw1, (D, H), minval=-lim1, maxval=lim1, dtype=jnp.float32)
        b1 = jax.random.uniform(kb1, (H,), minval=-lim1, maxval=lim1, dtype=jnp.float32)
        w2 = jax.random.uniform(kw2, (H, 1), minval=-lim2, maxval=lim2, dtype=jnp.float32)
        b2 = jax.random.uniform(kb2, (1,), minval=-lim2, maxval=lim2, dtype=jnp.float32)
        return x, w1, b1, w2, b2

    k1, k2 = jax.random.split(key)

    # Main case (lane-dense path): (batch=2, seq=8, input_dim=32), hidden=16.
    x, w1, b1, w2, b2 = make_case(k1, B=2, S=8, D=32, H=16)
    out = jax.block_until_ready(additive_attention(x, w1, b1, w2, b2))
    ref = _reference(x, w1, b1, w2, b2)
    assert out.shape == x.shape
    assert jnp.allclose(out, ref, atol=1e-5, rtol=1e-5), "lane-dense path mismatch"

    # Fallback case (general 3-D-block path): S*D = 192 is not lane-aligned.
    x, w1, b1, w2, b2 = make_case(k2, B=2, S=8, D=24, H=16)
    out = jax.block_until_ready(additive_attention(x, w1, b1, w2, b2))
    ref = _reference(x, w1, b1, w2, b2)
    assert out.shape == x.shape
    assert jnp.allclose(out, ref, atol=1e-5, rtol=1e-5), "general path mismatch"

    print("KERNEL_OK")
</pallas_src>

<mosaic_0001>
module attributes {stable_mosaic.version = 11 : i64} {
  func.func @_lane_dense_kernel(%arg0: i32, %arg1: memref<2x256xf32, #tpu.memory_space<vmem>>, %arg2: memref<256x128xf32, #tpu.memory_space<vmem>>, %arg3: memref<1x128xf32, #tpu.memory_space<vmem>>, %arg4: memref<128x8xf32, #tpu.memory_space<vmem>>, %arg5: memref<8x256xf32, #tpu.memory_space<vmem>>, %arg6: memref<2x256xf32, #tpu.memory_space<vmem>>) attributes {dimension_semantics = [#tpu.dimension_semantics<parallel>], iteration_bounds = array<i64: 1>, scalar_prefetch = 0 : i64, scratch_operands = 0 : i64, tpu.core_type = #tpu.core_type<tc>, window_params = [{transform_indices = @transform_0, window_bounds = array<i64: 2, 256>}, {pipeline_mode = #tpu.pipeline_mode<synchronous>, transform_indices = @transform_1, window_bounds = array<i64: 256, 128>}, {pipeline_mode = #tpu.pipeline_mode<synchronous>, transform_indices = @transform_2, window_bounds = array<i64: 1, 128>}, {pipeline_mode = #tpu.pipeline_mode<synchronous>, transform_indices = @transform_3, window_bounds = array<i64: 128, 8>}, {pipeline_mode = #tpu.pipeline_mode<synchronous>, transform_indices = @transform_4, window_bounds = array<i64: 8, 256>}, {transform_indices = @transform_5, window_bounds = array<i64: 2, 256>}]} {
    %c0 = arith.constant 0 : index
    %c0_0 = arith.constant 0 : index
    %0 = vector.load %arg1[%c0, %c0_0] : memref<2x256xf32, #tpu.memory_space<vmem>>, vector<2x256xf32>
    %c0_1 = arith.constant 0 : index
    %c0_2 = arith.constant 0 : index
    %1 = vector.load %arg2[%c0_1, %c0_2] : memref<256x128xf32, #tpu.memory_space<vmem>>, vector<256x128xf32>
    %cst = arith.constant dense<0.000000e+00> : vector<2x128xf32>
    %2 = tpu.matmul %0, %1, %cst {dimension_numbers = #tpu.dot_dimension_numbers<[1], [0], [0], [1], [0, 0, 1, 1], [], []>, precision = #tpu.contract_precision<fp32>} : vector<2x256xf32>, vector<256x128xf32>, vector<2x128xf32> -> vector<2x128xf32>
    %c0_3 = arith.constant 0 : index
    %c0_4 = arith.constant 0 : index
    %3 = vector.load %arg3[%c0_3, %c0_4] : memref<1x128xf32, #tpu.memory_space<vmem>>, vector<1x128xf32>
    %4 = vector.broadcast %3 : vector<1x128xf32> to vector<2x128xf32>
    %5 = arith.addf %2, %4 : vector<2x128xf32>
    %6 = math.tanh %5 : vector<2x128xf32>
    %c0_5 = arith.constant 0 : index
    %c0_6 = arith.constant 0 : index
    %7 = vector.load %arg4[%c0_5, %c0_6] : memref<128x8xf32, #tpu.memory_space<vmem>>, vector<128x8xf32>
    %cst_7 = arith.constant dense<0.000000e+00> : vector<2x8xf32>
    %8 = tpu.matmul %6, %7, %cst_7 {dimension_numbers = #tpu.dot_dimension_numbers<[1], [0], [0], [1], [0, 0, 1, 1], [], []>, precision = #tpu.contract_precision<fp32>} : vector<2x128xf32>, vector<128x8xf32>, vector<2x8xf32> -> vector<2x8xf32>
    %cst_8 = arith.constant dense<0xFF800000> : vector<2xf32>
    %9 = vector.multi_reduction <maximumf>, %8, %cst_8 [1] : vector<2x8xf32> to vector<2xf32>
    %10 = vector.shape_cast %9 : vector<2xf32> to vector<2x1xf32>
    %11 = vector.broadcast %10 : vector<2x1xf32> to vector<2x8xf32>
    %12 = arith.subf %8, %11 : vector<2x8xf32>
    %13 = math.exp %12 : vector<2x8xf32>
    %cst_9 = arith.constant dense<0.000000e+00> : vector<2xf32>
    %14 = vector.multi_reduction <add>, %13, %cst_9 [1] : vector<2x8xf32> to vector<2xf32>
    %15 = vector.shape_cast %14 : vector<2xf32> to vector<2x1xf32>
    %16 = tpu.reciprocal %15 {approx = true} : vector<2x1xf32> -> vector<2x1xf32>
    %17 = arith.mulf %15, %16 : vector<2x1xf32>
    %cst_10 = arith.constant 2.000000e+00 : f32
    %18 = vector.broadcast %cst_10 : f32 to vector<2x1xf32>
    %19 = arith.subf %18, %17 : vector<2x1xf32>
    %20 = arith.mulf %16, %19 : vector<2x1xf32>
    %21 = vector.broadcast %20 : vector<2x1xf32> to vector<2x8xf32>
    %22 = arith.mulf %13, %21 : vector<2x8xf32>
    %c0_11 = arith.constant 0 : index
    %c0_12 = arith.constant 0 : index
    %23 = vector.load %arg5[%c0_11, %c0_12] : memref<8x256xf32, #tpu.memory_space<vmem>>, vector<8x256xf32>
    %cst_13 = arith.constant dense<0.000000e+00> : vector<2x256xf32>
    %24 = tpu.matmul %22, %23, %cst_13 {dimension_numbers = #tpu.dot_dimension_numbers<[1], [0], [0], [1], [0, 0, 1, 1], [], []>, precision = #tpu.contract_precision<fp32>} : vector<2x8xf32>, vector<8x256xf32>, vector<2x256xf32> -> vector<2x256xf32>
    %25 = arith.mulf %0, %24 : vector<2x256xf32>
    %c0_14 = arith.constant 0 : index
    %c0_15 = arith.constant 0 : index
    %26 = vector.load %arg6[%c0_14, %c0_15] : memref<2x256xf32, #tpu.memory_space<vmem>>, vector<2x256xf32>
    tpu.vector_store %arg6[%c0_14, %c0_15], %25 {strides = array<i32>} : memref<2x256xf32, #tpu.memory_space<vmem>>, vector<2x256xf32>,
    return
  }
  func.func @transform_0(%arg0: i32) -> (i32, i32) {
    %c0_i32 = arith.constant 0 : i32
    %c0_i32_0 = arith.constant 0 : i32
    return %arg0, %c0_i32 : i32, i32
  }
  func.func @transform_1(%arg0: i32) -> (i32, i32) {
    %c0_i32 = arith.constant 0 : i32
    %c0_i32_0 = arith.constant 0 : i32
    %c0_i32_1 = arith.constant 0 : i32
    return %c0_i32, %c0_i32_0 : i32, i32
  }
  func.func @transform_2(%arg0: i32) -> (i32, i32) {
    %c0_i32 = arith.constant 0 : i32
    %c0_i32_0 = arith.constant 0 : i32
    %c0_i32_1 = arith.constant 0 : i32
    return %c0_i32, %c0_i32_0 : i32, i32
  }
  func.func @transform_3(%arg0: i32) -> (i32, i32) {
    %c0_i32 = arith.constant 0 : i32
    %c0_i32_0 = arith.constant 0 : i32
    %c0_i32_1 = arith.constant 0 : i32
    return %c0_i32, %c0_i32_0 : i32, i32
  }
  func.func @transform_4(%arg0: i32) -> (i32, i32) {
    %c0_i32 = arith.constant 0 : i32
    %c0_i32_0 = arith.constant 0 : i32
    %c0_i32_1 = arith.constant 0 : i32
    return %c0_i32, %c0_i32_0 : i32, i32
  }
  func.func @transform_5(%arg0: i32) -> (i32, i32) {
    %c0_i32 = arith.constant 0 : i32
    %c0_i32_0 = arith.constant 0 : i32
    return %arg0, %c0_i32 : i32, i32
  }
}

</mosaic_0001>

<llo_original>
// kernel: tpu_custom_call.1
$region0: #{tpu_custom_call.1}
  #allocation0 [shape = 'u32[]', space=smem, size = 0x4, offset = 0x4, fixed_abs, tag = 'smem constant byte address 0x4 - core index']
  #allocation1 [shape = 'u32[72,128]{1,0:T(1,128)}', space=vmem, size = 0x9000, scoped, tag = 'internal scratch']
  %s0 = inlined_call_operand.vmem [shape: f32[2,256], index: 0, kind: input, shape index: {}]
  %s1 = inlined_call_operand.hbm [shape: f32[256,128], index: 1, kind: input, shape index: {}]
  %s2 = inlined_call_operand.vmem [shape: f32[1,128], index: 2, kind: input, shape index: {}]
  %s3 = inlined_call_operand.vmem [shape: f32[128,8], index: 3, kind: input, shape index: {}]
  %s4 = inlined_call_operand.vmem [shape: f32[8,256], index: 4, kind: input, shape index: {}]
  %s5 = inlined_call_operand.hbm [shape: f32[2,256], index: 5, kind: output, shape index: {}]
  %s6 = sld [smem:[#allocation0]]
  $region34: #{tpu_custom_call.1} parent=0
    _
  %s8 = ssub.s32 1, %s6
  %s9 = scalar_select 0, %s8, %s6
  $region1: #{tpu_custom_call.1} parent=0
    #allocation2 [shape = 'u8[131072]{0}', space=vmem, size = 0x20000, scoped, tag = 'input window, operand 1, single buffered']
    #allocation3 [shape = 's32[1]{0}', space=sflag, size = 0x4, scoped, tag = 'scoped memory for tpu_custom_call.1']
    #allocation4 [shape = 's32[1]{0}', space=sflag, size = 0x4, scoped, tag = 'scoped memory for tpu_custom_call.1']
    #allocation5 [shape = 'u8[2048]{0}', space=vmem, size = 0x800, scoped, tag = 'output window, operand 0, single buffered']
    %10 = vsyncpa [#allocation3], 0
    %11 = vsyncpa [#allocation4], 0
    // Predicated region
    $region2: #{tpu_custom_call.1} parent=1 // pred_check
      _
    $region3: #{tpu_custom_call.1} parent=1 // pred_check_branch
      %13 = sbr.rel (0) target = $region5
    $region4: #{tpu_custom_call.1} parent=1 // pred_region
      _
    $region5: #{tpu_custom_call.1} parent=1 // pred_fallthru
      _
    // Predicated region
    $region6: #{tpu_custom_call.1} parent=1 // pred_check
      _
    $region7: #{tpu_custom_call.1} parent=1 // pred_check_branch
      %15 = sbr.rel (0) target = $region9
    $region8: #{tpu_custom_call.1} parent=1 // pred_region
      %17 = vsyncadd [#allocation3], 0
      %s18 = sshll.u32 %s1, 4
      %s19 = int_to_ptr.hbm [resolvable:$true] %s18
      %s20 = sshll.u32 [#allocation2], 4
      %s21 = int_to_ptr.vmem [resolvable:$true] %s20
      %26 = dma.hbm_to_vmem [thread:$0]  %s19, 4096, %s21, [#allocation3], 128, 128, 8
    $region9: #{tpu_custom_call.1} parent=1 // pred_fallthru
      _
    // Predicated region
    $region10: #{tpu_custom_call.1} parent=1 // pred_check
      _
    $region11: #{tpu_custom_call.1} parent=1 // pred_check_branch
      %28 = sbr.rel (0) target = $region13
    $region12: #{tpu_custom_call.1} parent=1 // pred_region
      _
    $region13: #{tpu_custom_call.1} parent=1 // pred_fallthru
      _
    // Predicated region
    $region14: #{tpu_custom_call.1} parent=1 // pred_check
      _
    $region15: #{tpu_custom_call.1} parent=1 // pred_check_branch
      %30 = sbr.rel (0) target = $region17
    $region16: #{tpu_custom_call.1} parent=1 // pred_region
      _
    $region17: #{tpu_custom_call.1} parent=1 // pred_fallthru
      _
    // Predicated region
    $region18: #{tpu_custom_call.1} parent=1 // pred_check
      _
    $region19: #{tpu_custom_call.1} parent=1 // pred_check_branch
      %32 = sbr.rel (0) target = $region21
    $region20: #{tpu_custom_call.1} parent=1 // pred_region
      _
    $region21: #{tpu_custom_call.1} parent=1 // pred_fallthru
      _
    // Predicated region
    $region22: #{tpu_custom_call.1} parent=1 // pred_check
      _
    $region23: #{tpu_custom_call.1} parent=1 // pred_check_branch
      %34 = sbr.rel (0) target = $region25
    $region24: #{tpu_custom_call.1} parent=1 // pred_region
      %36 = dma.done [#allocation3], 4096
    $region25: #{tpu_custom_call.1} parent=1 // pred_fallthru
      _
    %v37 = vld [vmem:[%s0] sm:$0xf]
    %v38 = vld [vmem:[#allocation2] sm:$0xff]
    %v39 = vld [vmem:[#allocation2 + $0x8] sm:$0xff]
    %v40 = vld [vmem:[#allocation2 + $0x10] sm:$0xff]
    %v41 = vld [vmem:[#allocation2 + $0x18] sm:$0xff]
    %v42 = vld [vmem:[#allocation2 + $0x20] sm:$0xff]
    %v43 = vld [vmem:[#allocation2 + $0x28] sm:$0xff]
    %v44 = vld [vmem:[#allocation2 + $0x30] sm:$0xff]
    %v45 = vld [vmem:[#allocation2 + $0x38] sm:$0xff]
    %v46 = vld [vmem:[#allocation2 + $0x40] sm:$0xff]
    %v47 = vld [vmem:[#allocation2 + $0x48] sm:$0xff]
    %v48 = vld [vmem:[#allocation2 + $0x50] sm:$0xff]
    %v49 = vld [vmem:[#allocation2 + $0x58] sm:$0xff]
    %v50 = vld [vmem:[#allocation2 + $0x60] sm:$0xff]
    %v51 = vld [vmem:[#allocation2 + $0x68] sm:$0xff]
    %v52 = vld [vmem:[#allocation2 + $0x70] sm:$0xff]
    %v53 = vld [vmem:[#allocation2 + $0x78] sm:$0xff]
    %v54 = vld [vmem:[#allocation2 + $0x80] sm:$0xff]
    %v55 = vld [vmem:[#allocation2 + $0x88] sm:$0xff]
    %v56 = vld [vmem:[#allocation2 + $0x90] sm:$0xff]
    %v57 = vld [vmem:[#allocation2 + $0x98] sm:$0xff]
    %v58 = vld [vmem:[#allocation2 + $0xa0] sm:$0xff]
    %v59 = vld [vmem:[#allocation2 + $0xa8] sm:$0xff]
    %v60 = vld [vmem:[#allocation2 + $0xb0] sm:$0xff]
    %v61 = vld [vmem:[#allocation2 + $0xb8] sm:$0xff]
    %v62 = vld [vmem:[#allocation2 + $0xc0] sm:$0xff]
    %v63 = vld [vmem:[#allocation2 + $0xc8] sm:$0xff]
    %v64 = vld [vmem:[#allocation2 + $0xd0] sm:$0xff]
    %v65 = vld [vmem:[#allocation2 + $0xd8] sm:$0xff]
    %v66 = vld [vmem:[#allocation2 + $0xe0] sm:$0xff]
    %v67 = vld [vmem:[#allocation2 + $0xe8] sm:$0xff]
    %v68 = vld [vmem:[#allocation2 + $0xf0] sm:$0xff]
    %v69 = vld [vmem:[#allocation2 + $0xf8] sm:$0xff]
    %v70 = vld [vmem:[%s2] sm:$0x1]
    %v72 = vperm.slane %v70, 0
    %75 = vst [vmem:[#allocation1] ss:$4 sm:$0xff] %v37
    %v76 = vld.sshfl [vmem:[#allocation1] sm:$0xff pattern:$0x73625140]
    %v77 = vld.sshfl [vmem:[#allocation1 + $0x8] sm:$0xff pattern:$0x73625140]
    %v80 = vand.u32 %v53, 4294901760
    %81 = vmatpush.msra.mxu0 %v80
    %v82 = vand.u32 %v52, 4294901760
    %83 = vmatpush.msra.mxu0 %v82
    %v84 = vand.u32 %v51, 4294901760
    %85 = vmatpush.msra.mxu0 %v84
    %v86 = vand.u32 %v50, 4294901760
    %87 = vmatpush.msra.mxu0 %v86
    %v88 = vand.u32 %v49, 4294901760
    %89 = vmatpush.msra.mxu0 %v88
    %v90 = vand.u32 %v48, 4294901760
    %91 = vmatpush.msra.mxu0 %v90
    %v92 = vand.u32 %v47, 4294901760
    %93 = vmatpush.msra.mxu0 %v92
    %v94 = vand.u32 %v46, 4294901760
    %95 = vmatpush.msra.mxu0 %v94
    %v96 = vand.u32 %v45, 4294901760
    %97 = vmatpush.msra.mxu0 %v96
    %v98 = vand.u32 %v44, 4294901760
    %99 = vmatpush.msra.mxu0 %v98
    %v100 = vand.u32 %v43, 4294901760
    %101 = vmatpush.msra.mxu0 %v100
    %v102 = vand.u32 %v42, 4294901760
    %103 = vmatpush.msra.mxu0 %v102
    %v104 = vand.u32 %v41, 4294901760
    %105 = vmatpush.msra.mxu0 %v104
    %v106 = vand.u32 %v40, 4294901760
    %107 = vmatpush.msra.mxu0 %v106
    %v108 = vand.u32 %v39, 4294901760
    %109 = vmatpush.msra.mxu0 %v108
    %v110 = vand.u32 %v38, 4294901760
    %111 = vmatpush.msra.mxu0 %v110
    %v112 = vand.u32 %v76, 4294901760
    %v113 = vsub.f32 %v76, %v112
    %v114 = vand.u32 %v113, 4294901760
    %v115 = vsub.f32 %v113, %v114
    %v116 = vand.u32 %v115, 4294901760
    %117 = vmatmul.f32.gmra.mxu0 %v116
    %v118 = vpop.f32.mrf.mxu0
    %v119 = vadd.f32 %v72, %v118
    %120 = vdwg.mxu0
    %v121 = vand.u32 %v53, 4294901760
    %v122 = vsub.f32 %v53, %v121
    %v123 = vand.u32 %v122, 4294901760
    %v124 = vsub.f32 %v122, %v123
    %v125 = vand.u32 %v124, 4294901760
    %126 = vmatpush.msra.mxu0 %v125
    %v127 = vand.u32 %v52, 4294901760
    %v128 = vsub.f32 %v52, %v127
    %v129 = vand.u32 %v128, 4294901760
    %v130 = vsub.f32 %v128, %v129
    %v131 = vand.u32 %v130, 4294901760
    %132 = vmatpush.msra.mxu0 %v131
    %v133 = vand.u32 %v51, 4294901760
    %v134 = vsub.f32 %v51, %v133
    %v135 = vand.u32 %v134, 4294901760
    %v136 = vsub.f32 %v134, %v135
    %v137 = vand.u32 %v136, 4294901760
    %138 = vmatpush.msra.mxu0 %v137
    %v139 = vand.u32 %v50, 4294901760
    %v140 = vsub.f32 %v50, %v139
    %v141 = vand.u32 %v140, 4294901760
    %v142 = vsub.f32 %v140, %v141
    %v143 = vand.u32 %v142, 4294901760
    %144 = vmatpush.msra.mxu0 %v143
    %v145 = vand.u32 %v49, 4294901760
    %v146 = vsub.f32 %v49, %v145
    %v147 = vand.u32 %v146, 4294901760
    %v148 = vsub.f32 %v146, %v147
    %v149 = vand.u32 %v148, 4294901760
    %150 = vmatpush.msra.mxu0 %v149
    %v151 = vand.u32 %v48, 4294901760
    %v152 = vsub.f32 %v48, %v151
    %v153 = vand.u32 %v152, 4294901760
    %v154 = vsub.f32 %v152, %v153
    %v155 = vand.u32 %v154, 4294901760
    %156 = vmatpush.msra.mxu0 %v155
    %v157 = vand.u32 %v47, 4294901760
    %v158 = vsub.f32 %v47, %v157
    %v159 = vand.u32 %v158, 4294901760
    %v160 = vsub.f32 %v158, %v159
    %v161 = vand.u32 %v160, 4294901760
    %162 = vmatpush.msra.mxu0 %v161
    %v163 = vand.u32 %v46, 4294901760
    %v164 = vsub.f32 %v46, %v163
    %v165 = vand.u32 %v164, 4294901760
    %v166 = vsub.f32 %v164, %v165
    %v167 = vand.u32 %v166, 4294901760
    %168 = vmatpush.msra.mxu0 %v167
    %v169 = vand.u32 %v45, 4294901760
    %v170 = vsub.f32 %v45, %v169
    %v171 = vand.u32 %v170, 4294901760
    %v172 = vsub.f32 %v170, %v171
    %v173 = vand.u32 %v172, 4294901760
    %174 = vmatpush.msra.mxu0 %v173
    %v175 = vand.u32 %v44, 4294901760
    %v176 = vsub.f32 %v44, %v175
    %v177 = vand.u32 %v176, 4294901760
    %v178 = vsub.f32 %v176, %v177
    %v179 = vand.u32 %v178, 4294901760
    %180 = vmatpush.msra.mxu0 %v179
    %v181 = vand.u32 %v43, 4294901760
    %v182 = vsub.f32 %v43, %v181
    %v183 = vand.u32 %v182, 4294901760
    %v184 = vsub.f32 %v182, %v183
    %v185 = vand.u32 %v184, 4294901760
    %186 = vmatpush.msra.mxu0 %v185
    %v187 = vand.u32 %v42, 4294901760
    %v188 = vsub.f32 %v42, %v187
    %v189 = vand.u32 %v188, 4294901760
    %v190 = vsub.f32 %v188, %v189
    %v191 = vand.u32 %v190, 4294901760
    %192 = vmatpush.msra.mxu0 %v191
    %v193 = vand.u32 %v41, 4294901760
    %v194 = vsub.f32 %v41, %v193
    %v195 = vand.u32 %v194, 4294901760
    %v196 = vsub.f32 %v194, %v195
    %v197 = vand.u32 %v196, 4294901760
    %198 = vmatpush.msra.mxu0 %v197
    %v199 = vand.u32 %v40, 4294901760
    %v200 = vsub.f32 %v40, %v199
    %v201 = vand.u32 %v200, 4294901760
    %v202 = vsub.f32 %v200, %v201
    %v203 = vand.u32 %v202, 4294901760
    %204 = vmatpush.msra.mxu0 %v203
    %v205 = vand.u32 %v39, 4294901760
    %v206 = vsub.f32 %v39, %v205
    %v207 = vand.u32 %v206, 4294901760
    %v208 = vsub.f32 %v206, %v207
    %v209 = vand.u32 %v208, 4294901760
    %210 = vmatpush.msra.mxu0 %v209
    %v211 = vand.u32 %v38, 4294901760
    %v212 = vsub.f32 %v38, %v211
    %v213 = vand.u32 %v212, 4294901760
    %v214 = vsub.f32 %v212, %v213
    %v215 = vand.u32 %v214, 4294901760
    %216 = vmatpush.msra.mxu0 %v215
    %v217 = vand.u32 %v76, 4294901760
    %218 = vmatmul.f32.gmra.mxu0 %v217
    %v219 = vpop.f32.mrf.mxu0
    %v220 = vadd.f32 %v119, %v219
    %221 = vdwg.mxu0
    %v222 = vand.u32 %v53, 4294901760
    %v223 = vsub.f32 %v53, %v222
    %224 = vmatpush.msra.mxu0 %v223
    %v225 = vand.u32 %v52, 4294901760
    %v226 = vsub.f32 %v52, %v225
    %227 = vmatpush.msra.mxu0 %v226
    %v228 = vand.u32 %v51, 4294901760
    %v229 = vsub.f32 %v51, %v228
    %230 = vmatpush.msra.mxu0 %v229
    %v231 = vand.u32 %v50, 4294901760
    %v232 = vsub.f32 %v50, %v231
    %233 = vmatpush.msra.mxu0 %v232
    %v234 = vand.u32 %v49, 4294901760
    %v235 = vsub.f32 %v49, %v234
    %236 = vmatpush.msra.mxu0 %v235
    %v237 = vand.u32 %v48, 4294901760
    %v238 = vsub.f32 %v48, %v237
    %239 = vmatpush.msra.mxu0 %v238
    %v240 = vand.u32 %v47, 4294901760
    %v241 = vsub.f32 %v47, %v240
    %242 = vmatpush.msra.mxu0 %v241
    %v243 = vand.u32 %v46, 4294901760
    %v244 = vsub.f32 %v46, %v243
    %245 = vmatpush.msra.mxu0 %v244
    %v246 = vand.u32 %v45, 4294901760
    %v247 = vsub.f32 %v45, %v246
    %248 = vmatpush.msra.mxu0 %v247
    %v249 = vand.u32 %v44, 4294901760
    %v250 = vsub.f32 %v44, %v249
    %251 = vmatpush.msra.mxu0 %v250
    %v252 = vand.u32 %v43, 4294901760
    %v253 = vsub.f32 %v43, %v252
    %254 = vmatpush.msra.mxu0 %v253
    %v255 = vand.u32 %v42, 4294901760
    %v256 = vsub.f32 %v42, %v255
    %257 = vmatpush.msra.mxu0 %v256
    %v258 = vand.u32 %v41, 4294901760
    %v259 = vsub.f32 %v41, %v258
    %260 = vmatpush.msra.mxu0 %v259
    %v261 = vand.u32 %v40, 4294901760
    %v262 = vsub.f32 %v40, %v261
    %263 = vmatpush.msra.mxu0 %v262
    %v264 = vand.u32 %v39, 4294901760
    %v265 = vsub.f32 %v39, %v264
    %266 = vmatpush.msra.mxu0 %v265
    %v267 = vand.u32 %v38, 4294901760
    %v268 = vsub.f32 %v38, %v267
    %269 = vmatpush.msra.mxu0 %v268
    %v270 = vand.u32 %v76, 4294901760
    %v271 = vsub.f32 %v76, %v270
    %272 = vmatmul.f32.gmra.mxu0 %v271
    %v273 = vpop.f32.mrf.mxu0
    %v274 = vadd.f32 %v220, %v273
    %275 = vdwg.mxu0
    %v276 = vand.u32 %v53, 4294901760
    %277 = vmatpush.msra.mxu0 %v276
    %v278 = vand.u32 %v52, 4294901760
    %279 = vmatpush.msra.mxu0 %v278
    %v280 = vand.u32 %v51, 4294901760
    %281 = vmatpush.msra.mxu0 %v280
    %v282 = vand.u32 %v50, 4294901760
    %283 = vmatpush.msra.mxu0 %v282
    %v284 = vand.u32 %v49, 4294901760
    %285 = vmatpush.msra.mxu0 %v284
    %v286 = vand.u32 %v48, 4294901760
    %287 = vmatpush.msra.mxu0 %v286
    %v288 = vand.u32 %v47, 4294901760
    %289 = vmatpush.msra.mxu0 %v288
    %v290 = vand.u32 %v46, 4294901760
    %291 = vmatpush.msra.mxu0 %v290
    %v292 = vand.u32 %v45, 4294901760
    %293 = vmatpush.msra.mxu0 %v292
    %v294 = vand.u32 %v44, 4294901760
    %295 = vmatpush.msra.mxu0 %v294
    %v296 = vand.u32 %v43, 4294901760
    %297 = vmatpush.msra.mxu0 %v296
    %v298 = vand.u32 %v42, 4294901760
    %299 = vmatpush.msra.mxu0 %v298
    %v300 = vand.u32 %v41, 4294901760
    %301 = vmatpush.msra.mxu0 %v300
    %v302 = vand.u32 %v40, 4294901760
    %303 = vmatpush.msra.mxu0 %v302
    %v304 = vand.u32 %v39, 4294901760
    %305 = vmatpush.msra.mxu0 %v304
    %v306 = vand.u32 %v38, 4294901760
    %307 = vmatpush.msra.mxu0 %v306
    %v308 = vand.u32 %v76, 4294901760
    %v309 = vsub.f32 %v76, %v308
    %v310 = vand.u32 %v309, 4294901760
    %311 = vmatmul.f32.gmra.mxu0 %v310
    %v312 = vpop.f32.mrf.mxu0
    %v313 = vadd.f32 %v274, %v312
    %314 = vdwg.mxu0
    %v315 = vand.u32 %v53, 4294901760
    %v316 = vsub.f32 %v53, %v315
    %v317 = vand.u32 %v316, 4294901760
    %318 = vmatpush.msra.mxu0 %v317
    %v319 = vand.u32 %v52, 4294901760
    %v320 = vsub.f32 %v52, %v319
    %v321 = vand.u32 %v320, 4294901760
    %322 = vmatpush.msra.mxu0 %v321
    %v323 = vand.u32 %v51, 4294901760
    %v324 = vsub.f32 %v51, %v323
    %v325 = vand.u32 %v324, 4294901760
    %326 = vmatpush.msra.mxu0 %v325
    %v327 = vand.u32 %v50, 4294901760
    %v328 = vsub.f32 %v50, %v327
    %v329 = vand.u32 %v328, 4294901760
    %330 = vmatpush.msra.mxu0 %v329
    %v331 = vand.u32 %v49, 4294901760
    %v332 = vsub.f32 %v49, %v331
    %v333 = vand.u32 %v332, 4294901760
    %334 = vmatpush.msra.mxu0 %v333
    %v335 = vand.u32 %v48, 4294901760
    %v336 = vsub.f32 %v48, %v335
    %v337 = vand.u32 %v336, 4294901760
    %338 = vmatpush.msra.mxu0 %v337
    %v339 = vand.u32 %v47, 4294901760
    %v340 = vsub.f32 %v47, %v339
    %v341 = vand.u32 %v340, 4294901760
    %342 = vmatpush.msra.mxu0 %v341
    %v343 = vand.u32 %v46, 4294901760
    %v344 = vsub.f32 %v46, %v343
    %v345 = vand.u32 %v344, 4294901760
    %346 = vmatpush.msra.mxu0 %v345
    %v347 = vand.u32 %v45, 4294901760
    %v348 = vsub.f32 %v45, %v347
    %v349 = vand.u32 %v348, 4294901760
    %350 = vmatpush.msra.mxu0 %v349
    %v351 = vand.u32 %v44, 4294901760
    %v352 = vsub.f32 %v44, %v351
    %v353 = vand.u32 %v352, 4294901760
    %354 = vmatpush.msra.mxu0 %v353
    %v355 = vand.u32 %v43, 4294901760
    %v356 = vsub.f32 %v43, %v355
    %v357 = vand.u32 %v356, 4294901760
    %358 = vmatpush.msra.mxu0 %v357
    %v359 = vand.u32 %v42, 4294901760
    %v360 = vsub.f32 %v42, %v359
    %v361 = vand.u32 %v360, 4294901760
    %362 = vmatpush.msra.mxu0 %v361
    %v363 = vand.u32 %v41, 4294901760
    %v364 = vsub.f32 %v41, %v363
    %v365 = vand.u32 %v364, 4294901760
    %366 = vmatpush.msra.mxu0 %v365
    %v367 = vand.u32 %v40, 4294901760
    %v368 = vsub.f32 %v40, %v367
    %v369 = vand.u32 %v368, 4294901760
    %370 = vmatpush.msra.mxu0 %v369
    %v371 = vand.u32 %v39, 4294901760
    %v372 = vsub.f32 %v39, %v371
    %v373 = vand.u32 %v372, 4294901760
    %374 = vmatpush.msra.mxu0 %v373
    %v375 = vand.u32 %v38, 4294901760
    %v376 = vsub.f32 %v38, %v375
    %v377 = vand.u32 %v376, 4294901760
    %378 = vmatpush.msra.mxu0 %v377
    %v379 = vand.u32 %v76, 4294901760
    %380 = vmatmul.f32.gmra.mxu0 %v379
    %v381 = vpop.f32.mrf.mxu0
    %v382 = vadd.f32 %v313, %v381
    %383 = vdwg.mxu0
    %v384 = vand.u32 %v53, 4294901760
    %385 = vmatpush.msra.mxu0 %v384
    %v386 = vand.u32 %v52, 4294901760
    %387 = vmatpush.msra.mxu0 %v386
    %v388 = vand.u32 %v51, 4294901760
    %389 = vmatpush.msra.mxu0 %v388
    %v390 = vand.u32 %v50, 4294901760
    %391 = vmatpush.msra.mxu0 %v390
    %v392 = vand.u32 %v49, 4294901760
    %393 = vmatpush.msra.mxu0 %v392
    %v394 = vand.u32 %v48, 4294901760
    %395 = vmatpush.msra.mxu0 %v394
    %v396 = vand.u32 %v47, 4294901760
    %397 = vmatpush.msra.mxu0 %v396
    %v398 = vand.u32 %v46, 4294901760
    %399 = vmatpush.msra.mxu0 %v398
    %v400 = vand.u32 %v45, 4294901760
    %401 = vmatpush.msra.mxu0 %v400
    %v402 = vand.u32 %v44, 4294901760
    %403 = vmatpush.msra.mxu0 %v402
    %v404 = vand.u32 %v43, 4294901760
    %405 = vmatpush.msra.mxu0 %v404
    %v406 = vand.u32 %v42, 4294901760
    %407 = vmatpush.msra.mxu0 %v406
    %v408 = vand.u32 %v41, 4294901760
    %409 = vmatpush.msra.mxu0 %v408
    %v410 = vand.u32 %v40, 4294901760
    %411 = vmatpush.msra.mxu0 %v410
    %v412 = vand.u32 %v39, 4294901760
    %413 = vmatpush.msra.mxu0 %v412
    %v414 = vand.u32 %v38, 4294901760
    %415 = vmatpush.msra.mxu0 %v414
    %v416 = vand.u32 %v76, 4294901760
    %417 = vmatmul.f32.gmra.mxu0 %v416
    %v418 = vpop.f32.mrf.mxu0
    %v419 = vadd.f32 %v382, %v418
    %420 = vdwg.mxu0
    %v421 = vand.u32 %v69, 4294901760
    %422 = vmatpush.msra.mxu0 %v421
    %v423 = vand.u32 %v68, 4294901760
    %424 = vmatpush.msra.mxu0 %v423
    %v425 = vand.u32 %v67, 4294901760
    %426 = vmatpush.msra.mxu0 %v425
    %v427 = vand.u32 %v66, 4294901760
    %428 = vmatpush.msra.mxu0 %v427
    %v429 = vand.u32 %v65, 4294901760
    %430 = vmatpush.msra.mxu0 %v429
    %v431 = vand.u32 %v64, 4294901760
    %432 = vmatpush.msra.mxu0 %v431
    %v433 = vand.u32 %v63, 4294901760
    %434 = vmatpush.msra.mxu0 %v433
    %v435 = vand.u32 %v62, 4294901760
    %436 = vmatpush.msra.mxu0 %v435
    %v437 = vand.u32 %v61, 4294901760
    %438 = vmatpush.msra.mxu0 %v437
    %v439 = vand.u32 %v60, 4294901760
    %440 = vmatpush.msra.mxu0 %v439
    %v441 = vand.u32 %v59, 4294901760
    %442 = vmatpush.msra.mxu0 %v441
    %v443 = vand.u32 %v58, 4294901760
    %444 = vmatpush.msra.mxu0 %v443
    %v445 = vand.u32 %v57, 4294901760
    %446 = vmatpush.msra.mxu0 %v445
    %v447 = vand.u32 %v56, 4294901760
    %448 = vmatpush.msra.mxu0 %v447
    %v449 = vand.u32 %v55, 4294901760
    %450 = vmatpush.msra.mxu0 %v449
    %v451 = vand.u32 %v54, 4294901760
    %452 = vmatpush.msra.mxu0 %v451
    %v453 = vand.u32 %v77, 4294901760
    %v454 = vsub.f32 %v77, %v453
    %v455 = vand.u32 %v454, 4294901760
    %v456 = vsub.f32 %v454, %v455
    %v457 = vand.u32 %v456, 4294901760
    %458 = vmatmul.f32.gmra.mxu0 %v457
    %v459 = vpop.f32.mrf.mxu0
    %v460 = vadd.f32 %v419, %v459
    %461 = vdwg.mxu0
    %v462 = vand.u32 %v69, 4294901760
    %v463 = vsub.f32 %v69, %v462
    %v464 = vand.u32 %v463, 4294901760
    %v465 = vsub.f32 %v463, %v464
    %v466 = vand.u32 %v465, 4294901760
    %467 = vmatpush.msra.mxu0 %v466
    %v468 = vand.u32 %v68, 4294901760
    %v469 = vsub.f32 %v68, %v468
    %v470 = vand.u32 %v469, 4294901760
    %v471 = vsub.f32 %v469, %v470
    %v472 = vand.u32 %v471, 4294901760
    %473 = vmatpush.msra.mxu0 %v472
    %v474 = vand.u32 %v67, 4294901760
    %v475 = vsub.f32 %v67, %v474
    %v476 = vand.u32 %v475, 4294901760
    %v477 = vsub.f32 %v475, %v476
    %v478 = vand.u32 %v477, 4294901760
    %479 = vmatpush.msra.mxu0 %v478
    %v480 = vand.u32 %v66, 4294901760
    %v481 = vsub.f32 %v66, %v480
    %v482 = vand.u32 %v481, 4294901760
    %v483 = vsub.f32 %v481, %v482
    %v484 = vand.u32 %v483, 4294901760
    %485 = vmatpush.msra.mxu0 %v484
    %v486 = vand.u32 %v65, 4294901760
    %v487 = vsub.f32 %v65, %v486
    %v488 = vand.u32 %v487, 4294901760
    %v489 = vsub.f32 %v487, %v488
    %v490 = vand.u32 %v489, 4294901760
    %491 = vmatpush.msra.mxu0 %v490
    %v492 = vand.u32 %v64, 4294901760
    %v493 = vsub.f32 %v64, %v492
    %v494 = vand.u32 %v493, 4294901760
    %v495 = vsub.f32 %v493, %v494
    %v496 = vand.u32 %v495, 4294901760
    %497 = vmatpush.msra.mxu0 %v496
    %v498 = vand.u32 %v63, 4294901760
    %v499 = vsub.f32 %v63, %v498
    %v500 = vand.u32 %v499, 4294901760
    %v501 = vsub.f32 %v499, %v500
    %v502 = vand.u32 %v501, 4294901760
    %503 = vmatpush.msra.mxu0 %v502
    %v504 = vand.u32 %v62, 4294901760
    %v505 = vsub.f32 %v62, %v504
    %v506 = vand.u32 %v505, 4294901760
    %v507 = vsub.f32 %v505, %v506
    %v508 = vand.u32 %v507, 4294901760
    %509 = vmatpush.msra.mxu0 %v508
    %v510 = vand.u32 %v61, 4294901760
    %v511 = vsub.f32 %v61, %v510
    %v512 = vand.u32 %v511, 4294901760
    %v513 = vsub.f32 %v511, %v512
    %v514 = vand.u32 %v513, 4294901760
    %515 = vmatpush.msra.mxu0 %v514
    %v516 = vand.u32 %v60, 4294901760
    %v517 = vsub.f32 %v60, %v516
    %v518 = vand.u32 %v517, 4294901760
    %v519 = vsub.f32 %v517, %v518
    %v520 = vand.u32 %v519, 4294901760
    %521 = vmatpush.msra.mxu0 %v520
    %v522 = vand.u32 %v59, 4294901760
    %v523 = vsub.f32 %v59, %v522
    %v524 = vand.u32 %v523, 4294901760
    %v525 = vsub.f32 %v523, %v524
    %v526 = vand.u32 %v525, 4294901760
    %527 = vmatpush.msra.mxu0 %v526
    %v528 = vand.u32 %v58, 4294901760
    %v529 = vsub.f32 %v58, %v528
    %v530 = vand.u32 %v529, 4294901760
    %v531 = vsub.f32 %v529, %v530
    %v532 = vand.u32 %v531, 4294901760
    %533 = vmatpush.msra.mxu0 %v532
    %v534 = vand.u32 %v57, 4294901760
    %v535 = vsub.f32 %v57, %v534
    %v536 = vand.u32 %v535, 4294901760
    %v537 = vsub.f32 %v535, %v536
    %v538 = vand.u32 %v537, 4294901760
    %539 = vmatpush.msra.mxu0 %v538
    %v540 = vand.u32 %v56, 4294901760
    %v541 = vsub.f32 %v56, %v540
    %v542 = vand.u32 %v541, 4294901760
    %v543 = vsub.f32 %v541, %v542
    %v544 = vand.u32 %v543, 4294901760
    %545 = vmatpush.msra.mxu0 %v544
    %v546 = vand.u32 %v55, 4294901760
    %v547 = vsub.f32 %v55, %v546
    %v548 = vand.u32 %v547, 4294901760
    %v549 = vsub.f32 %v547, %v548
    %v550 = vand.u32 %v549, 4294901760
    %551 = vmatpush.msra.mxu0 %v550
    %v552 = vand.u32 %v54, 4294901760
    %v553 = vsub.f32 %v54, %v552
    %v554 = vand.u32 %v553, 4294901760
    %v555 = vsub.f32 %v553, %v554
    %v556 = vand.u32 %v555, 4294901760
    %557 = vmatpush.msra.mxu0 %v556
    %v558 = vand.u32 %v77, 4294901760
    %559 = vmatmul.f32.gmra.mxu0 %v558
    %v560 = vpop.f32.mrf.mxu0
    %v561 = vadd.f32 %v460, %v560
    %562 = vdwg.mxu0
    %v563 = vand.u32 %v69, 4294901760
    %v564 = vsub.f32 %v69, %v563
    %565 = vmatpush.msra.mxu0 %v564
    %v566 = vand.u32 %v68, 4294901760
    %v567 = vsub.f32 %v68, %v566
    %568 = vmatpush.msra.mxu0 %v567
    %v569 = vand.u32 %v67, 4294901760
    %v570 = vsub.f32 %v67, %v569
    %571 = vmatpush.msra.mxu0 %v570
    %v572 = vand.u32 %v66, 4294901760
    %v573 = vsub.f32 %v66, %v572
    %574 = vmatpush.msra.mxu0 %v573
    %v575 = vand.u32 %v65, 4294901760
    %v576 = vsub.f32 %v65, %v575
    %577 = vmatpush.msra.mxu0 %v576
    %v578 = vand.u32 %v64, 4294901760
    %v579 = vsub.f32 %v64, %v578
    %580 = vmatpush.msra.mxu0 %v579
    %v581 = vand.u32 %v63, 4294901760
    %v582 = vsub.f32 %v63, %v581
    %583 = vmatpush.msra.mxu0 %v582
    %v584 = vand.u32 %v62, 4294901760
    %v585 = vsub.f32 %v62, %v584
    %586 = vmatpush.msra.mxu0 %v585
    %v587 = vand.u32 %v61, 4294901760
    %v588 = vsub.f32 %v61, %v587
    %589 = vmatpush.msra.mxu0 %v588
    %v590 = vand.u32 %v60, 4294901760
    %v591 = vsub.f32 %v60, %v590
    %592 = vmatpush.msra.mxu0 %v591
    %v593 = vand.u32 %v59, 4294901760
    %v594 = vsub.f32 %v59, %v593
    %595 = vmatpush.msra.mxu0 %v594
    %v596 = vand.u32 %v58, 4294901760
    %v597 = vsub.f32 %v58, %v596
    %598 = vmatpush.msra.mxu0 %v597
    %v599 = vand.u32 %v57, 4294901760
    %v600 = vsub.f32 %v57, %v599
    %601 = vmatpush.msra.mxu0 %v600
    %v602 = vand.u32 %v56, 4294901760
    %v603 = vsub.f32 %v56, %v602
    %604 = vmatpush.msra.mxu0 %v603
    %v605 = vand.u32 %v55, 4294901760
    %v606 = vsub.f32 %v55, %v605
    %607 = vmatpush.msra.mxu0 %v606
    %v608 = vand.u32 %v54, 4294901760
    %v609 = vsub.f32 %v54, %v608
    %610 = vmatpush.msra.mxu0 %v609
    %v611 = vand.u32 %v77, 4294901760
    %v612 = vsub.f32 %v77, %v611
    %613 = vmatmul.f32.gmra.mxu0 %v612
    %v614 = vpop.f32.mrf.mxu0
    %v615 = vadd.f32 %v561, %v614
    %616 = vdwg.mxu0
    %v617 = vand.u32 %v69, 4294901760
    %618 = vmatpush.msra.mxu0 %v617
    %v619 = vand.u32 %v68, 4294901760
    %620 = vmatpush.msra.mxu0 %v619
    %v621 = vand.u32 %v67, 4294901760
    %622 = vmatpush.msra.mxu0 %v621
    %v623 = vand.u32 %v66, 4294901760
    %624 = vmatpush.msra.mxu0 %v623
    %v625 = vand.u32 %v65, 4294901760
    %626 = vmatpush.msra.mxu0 %v625
    %v627 = vand.u32 %v64, 4294901760
    %628 = vmatpush.msra.mxu0 %v627
    %v629 = vand.u32 %v63, 4294901760
    %630 = vmatpush.msra.mxu0 %v629
    %v631 = vand.u32 %v62, 4294901760
    %632 = vmatpush.msra.mxu0 %v631
    %v633 = vand.u32 %v61, 4294901760
    %634 = vmatpush.msra.mxu0 %v633
    %v635 = vand.u32 %v60, 4294901760
    %636 = vmatpush.msra.mxu0 %v635
    %v637 = vand.u32 %v59, 4294901760
    %638 = vmatpush.msra.mxu0 %v637
    %v639 = vand.u32 %v58, 4294901760
    %640 = vmatpush.msra.mxu0 %v639
    %v641 = vand.u32 %v57, 4294901760
    %642 = vmatpush.msra.mxu0 %v641
    %v643 = vand.u32 %v56, 4294901760
    %644 = vmatpush.msra.mxu0 %v643
    %v645 = vand.u32 %v55, 4294901760
    %646 = vmatpush.msra.mxu0 %v645
    %v647 = vand.u32 %v54, 4294901760
    %648 = vmatpush.msra.mxu0 %v647
    %v649 = vand.u32 %v77, 4294901760
    %v650 = vsub.f32 %v77, %v649
    %v651 = vand.u32 %v650, 4294901760
    %652 = vmatmul.f32.gmra.mxu0 %v651
    %v653 = vpop.f32.mrf.mxu0
    %v654 = vadd.f32 %v615, %v653
    %655 = vdwg.mxu0
    %v656 = vand.u32 %v69, 4294901760
    %v657 = vsub.f32 %v69, %v656
    %v658 = vand.u32 %v657, 4294901760
    %659 = vmatpush.msra.mxu0 %v658
    %v660 = vand.u32 %v68, 4294901760
    %v661 = vsub.f32 %v68, %v660
    %v662 = vand.u32 %v661, 4294901760
    %663 = vmatpush.msra.mxu0 %v662
    %v664 = vand.u32 %v67, 4294901760
    %v665 = vsub.f32 %v67, %v664
    %v666 = vand.u32 %v665, 4294901760
    %667 = vmatpush.msra.mxu0 %v666
    %v668 = vand.u32 %v66, 4294901760
    %v669 = vsub.f32 %v66, %v668
    %v670 = vand.u32 %v669, 4294901760
    %671 = vmatpush.msra.mxu0 %v670
    %v672 = vand.u32 %v65, 4294901760
    %v673 = vsub.f32 %v65, %v672
    %v674 = vand.u32 %v673, 4294901760
    %675 = vmatpush.msra.mxu0 %v674
    %v676 = vand.u32 %v64, 4294901760
    %v677 = vsub.f32 %v64, %v676
    %v678 = vand.u32 %v677, 4294901760
    %679 = vmatpush.msra.mxu0 %v678
    %v680 = vand.u32 %v63, 4294901760
    %v681 = vsub.f32 %v63, %v680
    %v682 = vand.u32 %v681, 4294901760
    %683 = vmatpush.msra.mxu0 %v682
    %v684 = vand.u32 %v62, 4294901760
    %v685 = vsub.f32 %v62, %v684
    %v686 = vand.u32 %v685, 4294901760
    %687 = vmatpush.msra.mxu0 %v686
    %v688 = vand.u32 %v61, 4294901760
    %v689 = vsub.f32 %v61, %v688
    %v690 = vand.u32 %v689, 4294901760
    %691 = vmatpush.msra.mxu0 %v690
    %v692 = vand.u32 %v60, 4294901760
    %v693 = vsub.f32 %v60, %v692
    %v694 = vand.u32 %v693, 4294901760
    %695 = vmatpush.msra.mxu0 %v694
    %v696 = vand.u32 %v59, 4294901760
    %v697 = vsub.f32 %v59, %v696
    %v698 = vand.u32 %v697, 4294901760
    %699 = vmatpush.msra.mxu0 %v698
    %v700 = vand.u32 %v58, 4294901760
    %v701 = vsub.f32 %v58, %v700
    %v702 = vand.u32 %v701, 4294901760
    %703 = vmatpush.msra.mxu0 %v702
    %v704 = vand.u32 %v57, 4294901760
    %v705 = vsub.f32 %v57, %v704
    %v706 = vand.u32 %v705, 4294901760
    %707 = vmatpush.msra.mxu0 %v706
    %v708 = vand.u32 %v56, 4294901760
    %v709 = vsub.f32 %v56, %v708
    %v710 = vand.u32 %v709, 4294901760
    %711 = vmatpush.msra.mxu0 %v710
    %v712 = vand.u32 %v55, 4294901760
    %v713 = vsub.f32 %v55, %v712
    %v714 = vand.u32 %v713, 4294901760
    %715 = vmatpush.msra.mxu0 %v714
    %v716 = vand.u32 %v54, 4294901760
    %v717 = vsub.f32 %v54, %v716
    %v718 = vand.u32 %v717, 4294901760
    %719 = vmatpush.msra.mxu0 %v718
    %v720 = vand.u32 %v77, 4294901760
    %721 = vmatmul.f32.gmra.mxu0 %v720
    %v722 = vpop.f32.mrf.mxu0
    %v723 = vadd.f32 %v654, %v722
    %724 = vdwg.mxu0
    %v725 = vand.u32 %v69, 4294901760
    %726 = vmatpush.msra.mxu0 %v725
    %v727 = vand.u32 %v68, 4294901760
    %728 = vmatpush.msra.mxu0 %v727
    %v729 = vand.u32 %v67, 4294901760
    %730 = vmatpush.msra.mxu0 %v729
    %v731 = vand.u32 %v66, 4294901760
    %732 = vmatpush.msra.mxu0 %v731
    %v733 = vand.u32 %v65, 4294901760
    %734 = vmatpush.msra.mxu0 %v733
    %v735 = vand.u32 %v64, 4294901760
    %736 = vmatpush.msra.mxu0 %v735
    %v737 = vand.u32 %v63, 4294901760
    %738 = vmatpush.msra.mxu0 %v737
    %v739 = vand.u32 %v62, 4294901760
    %740 = vmatpush.msra.mxu0 %v739
    %v741 = vand.u32 %v61, 4294901760
    %742 = vmatpush.msra.mxu0 %v741
    %v743 = vand.u32 %v60, 4294901760
    %744 = vmatpush.msra.mxu0 %v743
    %v745 = vand.u32 %v59, 4294901760
    %746 = vmatpush.msra.mxu0 %v745
    %v747 = vand.u32 %v58, 4294901760
    %748 = vmatpush.msra.mxu0 %v747
    %v749 = vand.u32 %v57, 4294901760
    %750 = vmatpush.msra.mxu0 %v749
    %v751 = vand.u32 %v56, 4294901760
    %752 = vmatpush.msra.mxu0 %v751
    %v753 = vand.u32 %v55, 4294901760
    %754 = vmatpush.msra.mxu0 %v753
    %v755 = vand.u32 %v54, 4294901760
    %756 = vmatpush.msra.mxu0 %v755
    %v757 = vand.u32 %v77, 4294901760
    %758 = vmatmul.f32.gmra.mxu0 %v757
    %v759 = vpop.f32.mrf.mxu0
    %v760 = vadd.f32 %v723, %v759
    %761 = vdwg.mxu0
    %v762 = vtanh.pop %v760
    %v763 = vld [vmem:[%s3] sm:$0xff]
    %v764 = vld [vmem:[%s3 + $0x8] sm:$0xff]
    %v765 = vld [vmem:[%s3 + $0x10] sm:$0xff]
    %v766 = vld [vmem:[%s3 + $0x18] sm:$0xff]
    %v767 = vld [vmem:[%s3 + $0x20] sm:$0xff]
    %v768 = vld [vmem:[%s3 + $0x28] sm:$0xff]
    %v769 = vld [vmem:[%s3 + $0x30] sm:$0xff]
    %v770 = vld [vmem:[%s3 + $0x38] sm:$0xff]
    %v771 = vld [vmem:[%s3 + $0x40] sm:$0xff]
    %v772 = vld [vmem:[%s3 + $0x48] sm:$0xff]
    %v773 = vld [vmem:[%s3 + $0x50] sm:$0xff]
    %v774 = vld [vmem:[%s3 + $0x58] sm:$0xff]
    %v775 = vld [vmem:[%s3 + $0x60] sm:$0xff]
    %v776 = vld [vmem:[%s3 + $0x68] sm:$0xff]
    %v777 = vld [vmem:[%s3 + $0x70] sm:$0xff]
    %v778 = vld [vmem:[%s3 + $0x78] sm:$0xff]
    %v779 = vand.u32 %v778, 4294901760
    %780 = vmatpush.msra.mxu0 %v779
    %v781 = vand.u32 %v777, 4294901760
    %782 = vmatpush.msra.mxu0 %v781
    %v783 = vand.u32 %v776, 4294901760
    %784 = vmatpush.msra.mxu0 %v783
    %v785 = vand.u32 %v775, 4294901760
    %786 = vmatpush.msra.mxu0 %v785
    %v787 = vand.u32 %v774, 4294901760
    %788 = vmatpush.msra.mxu0 %v787
    %v789 = vand.u32 %v773, 4294901760
    %790 = vmatpush.msra.mxu0 %v789
    %v791 = vand.u32 %v772, 4294901760
    %792 = vmatpush.msra.mxu0 %v791
    %v793 = vand.u32 %v771, 4294901760
    %794 = vmatpush.msra.mxu0 %v793
    %v795 = vand.u32 %v770, 4294901760
    %796 = vmatpush.msra.mxu0 %v795
    %v797 = vand.u32 %v769, 4294901760
    %798 = vmatpush.msra.mxu0 %v797
    %v799 = vand.u32 %v768, 4294901760
    %800 = vmatpush.msra.mxu0 %v799
    %v801 = vand.u32 %v767, 4294901760
    %802 = vmatpush.msra.mxu0 %v801
    %v803 = vand.u32 %v766, 4294901760
    %804 = vmatpush.msra.mxu0 %v803
    %v805 = vand.u32 %v765, 4294901760
    %806 = vmatpush.msra.mxu0 %v805
    %v807 = vand.u32 %v764, 4294901760
    %808 = vmatpush.msra.mxu0 %v807
    %v809 = vand.u32 %v763, 4294901760
    %810 = vmatpush.msra.mxu0 %v809
    %v811 = vand.u32 %v762, 4294901760
    %v812 = vsub.f32 %v762, %v811
    %v813 = vand.u32 %v812, 4294901760
    %v814 = vsub.f32 %v812, %v813
    %v815 = vand.u32 %v814, 4294901760
    %816 = vmatmul.f32.gmra.mxu0 %v815
    %v817 = vpop.f32.mrf.mxu0
    %v818 = vadd.f32 0.0, %v817
    %819 = vdwg.mxu0
    %v820 = vand.u32 %v778, 4294901760
    %v821 = vsub.f32 %v778, %v820
    %v822 = vand.u32 %v821, 4294901760
    %v823 = vsub.f32 %v821, %v822
    %v824 = vand.u32 %v823, 4294901760
    %825 = vmatpush.msra.mxu0 %v824
    %v826 = vand.u32 %v777, 4294901760
    %v827 = vsub.f32 %v777, %v826
    %v828 = vand.u32 %v827, 4294901760
    %v829 = vsub.f32 %v827, %v828
    %v830 = vand.u32 %v829, 4294901760
    %831 = vmatpush.msra.mxu0 %v830
    %v832 = vand.u32 %v776, 4294901760
    %v833 = vsub.f32 %v776, %v832
    %v834 = vand.u32 %v833, 4294901760
    %v835 = vsub.f32 %v833, %v834
    %v836 = vand.u32 %v835, 4294901760
    %837 = vmatpush.msra.mxu0 %v836
    %v838 = vand.u32 %v775, 4294901760
    %v839 = vsub.f32 %v775, %v838
    %v840 = vand.u32 %v839, 4294901760
    %v841 = vsub.f32 %v839, %v840
    %v842 = vand.u32 %v841, 4294901760
    %843 = vmatpush.msra.mxu0 %v842
    %v844 = vand.u32 %v774, 4294901760
    %v845 = vsub.f32 %v774, %v844
    %v846 = vand.u32 %v845, 4294901760
    %v847 = vsub.f32 %v845, %v846
    %v848 = vand.u32 %v847, 4294901760
    %849 = vmatpush.msra.mxu0 %v848
    %v850 = vand.u32 %v773, 4294901760
    %v851 = vsub.f32 %v773, %v850
    %v852 = vand.u32 %v851, 4294901760
    %v853 = vsub.f32 %v851, %v852
    %v854 = vand.u32 %v853, 4294901760
    %855 = vmatpush.msra.mxu0 %v854
    %v856 = vand.u32 %v772, 4294901760
    %v857 = vsub.f32 %v772, %v856
    %v858 = vand.u32 %v857, 4294901760
    %v859 = vsub.f32 %v857, %v858
    %v860 = vand.u32 %v859, 4294901760
    %861 = vmatpush.msra.mxu0 %v860
    %v862 = vand.u32 %v771, 4294901760
    %v863 = vsub.f32 %v771, %v862
    %v864 = vand.u32 %v863, 4294901760
    %v865 = vsub.f32 %v863, %v864
    %v866 = vand.u32 %v865, 4294901760
    %867 = vmatpush.msra.mxu0 %v866
    %v868 = vand.u32 %v770, 4294901760
    %v869 = vsub.f32 %v770, %v868
    %v870 = vand.u32 %v869, 4294901760
    %v871 = vsub.f32 %v869, %v870
    %v872 = vand.u32 %v871, 4294901760
    %873 = vmatpush.msra.mxu0 %v872
    %v874 = vand.u32 %v769, 4294901760
    %v875 = vsub.f32 %v769, %v874
    %v876 = vand.u32 %v875, 4294901760
    %v877 = vsub.f32 %v875, %v876
    %v878 = vand.u32 %v877, 4294901760
    %879 = vmatpush.msra.mxu0 %v878
    %v880 = vand.u32 %v768, 4294901760
    %v881 = vsub.f32 %v768, %v880
    %v882 = vand.u32 %v881, 4294901760
    %v883 = vsub.f32 %v881, %v882
    %v884 = vand.u32 %v883, 4294901760
    %885 = vmatpush.msra.mxu0 %v884
    %v886 = vand.u32 %v767, 4294901760
    %v887 = vsub.f32 %v767, %v886
    %v888 = vand.u32 %v887, 4294901760
    %v889 = vsub.f32 %v887, %v888
    %v890 = vand.u32 %v889, 4294901760
    %891 = vmatpush.msra.mxu0 %v890
    %v892 = vand.u32 %v766, 4294901760
    %v893 = vsub.f32 %v766, %v892
    %v894 = vand.u32 %v893, 4294901760
    %v895 = vsub.f32 %v893, %v894
    %v896 = vand.u32 %v895, 4294901760
    %897 = vmatpush.msra.mxu0 %v896
    %v898 = vand.u32 %v765, 4294901760
    %v899 = vsub.f32 %v765, %v898
    %v900 = vand.u32 %v899, 4294901760
    %v901 = vsub.f32 %v899, %v900
    %v902 = vand.u32 %v901, 4294901760
    %903 = vmatpush.msra.mxu0 %v902
    %v904 = vand.u32 %v764, 4294901760
    %v905 = vsub.f32 %v764, %v904
    %v906 = vand.u32 %v905, 4294901760
    %v907 = vsub.f32 %v905, %v906
    %v908 = vand.u32 %v907, 4294901760
    %909 = vmatpush.msra.mxu0 %v908
    %v910 = vand.u32 %v763, 4294901760
    %v911 = vsub.f32 %v763, %v910
    %v912 = vand.u32 %v911, 4294901760
    %v913 = vsub.f32 %v911, %v912
    %v914 = vand.u32 %v913, 4294901760
    %915 = vmatpush.msra.mxu0 %v914
    %v916 = vand.u32 %v762, 4294901760
    %917 = vmatmul.f32.gmra.mxu0 %v916
    %v918 = vpop.f32.mrf.mxu0
    %v919 = vadd.f32 %v818, %v918
    %920 = vdwg.mxu0
    %v921 = vand.u32 %v778, 4294901760
    %v922 = vsub.f32 %v778, %v921
    %923 = vmatpush.msra.mxu0 %v922
    %v924 = vand.u32 %v777, 4294901760
    %v925 = vsub.f32 %v777, %v924
    %926 = vmatpush.msra.mxu0 %v925
    %v927 = vand.u32 %v776, 4294901760
    %v928 = vsub.f32 %v776, %v927
    %929 = vmatpush.msra.mxu0 %v928
    %v930 = vand.u32 %v775, 4294901760
    %v931 = vsub.f32 %v775, %v930
    %932 = vmatpush.msra.mxu0 %v931
    %v933 = vand.u32 %v774, 4294901760
    %v934 = vsub.f32 %v774, %v933
    %935 = vmatpush.msra.mxu0 %v934
    %v936 = vand.u32 %v773, 4294901760
    %v937 = vsub.f32 %v773, %v936
    %938 = vmatpush.msra.mxu0 %v937
    %v939 = vand.u32 %v772, 4294901760
    %v940 = vsub.f32 %v772, %v939
    %941 = vmatpush.msra.mxu0 %v940
    %v942 = vand.u32 %v771, 4294901760
    %v943 = vsub.f32 %v771, %v942
    %944 = vmatpush.msra.mxu0 %v943
    %v945 = vand.u32 %v770, 4294901760
    %v946 = vsub.f32 %v770, %v945
    %947 = vmatpush.msra.mxu0 %v946
    %v948 = vand.u32 %v769, 4294901760
    %v949 = vsub.f32 %v769, %v948
    %950 = vmatpush.msra.mxu0 %v949
    %v951 = vand.u32 %v768, 4294901760
    %v952 = vsub.f32 %v768, %v951
    %953 = vmatpush.msra.mxu0 %v952
    %v954 = vand.u32 %v767, 4294901760
    %v955 = vsub.f32 %v767, %v954
    %956 = vmatpush.msra.mxu0 %v955
    %v957 = vand.u32 %v766, 4294901760
    %v958 = vsub.f32 %v766, %v957
    %959 = vmatpush.msra.mxu0 %v958
    %v960 = vand.u32 %v765, 4294901760
    %v961 = vsub.f32 %v765, %v960
    %962 = vmatpush.msra.mxu0 %v961
    %v963 = vand.u32 %v764, 4294901760
    %v964 = vsub.f32 %v764, %v963
    %965 = vmatpush.msra.mxu0 %v964
    %v966 = vand.u32 %v763, 4294901760
    %v967 = vsub.f32 %v763, %v966
    %968 = vmatpush.msra.mxu0 %v967
    %v969 = vand.u32 %v762, 4294901760
    %v970 = vsub.f32 %v762, %v969
    %971 = vmatmul.f32.gmra.mxu0 %v970
    %v972 = vpop.f32.mrf.mxu0
    %v973 = vadd.f32 %v919, %v972
    %974 = vdwg.mxu0
    %v975 = vand.u32 %v778, 4294901760
    %976 = vmatpush.msra.mxu0 %v975
    %v977 = vand.u32 %v777, 4294901760
    %978 = vmatpush.msra.mxu0 %v977
    %v979 = vand.u32 %v776, 4294901760
    %980 = vmatpush.msra.mxu0 %v979
    %v981 = vand.u32 %v775, 4294901760
    %982 = vmatpush.msra.mxu0 %v981
    %v983 = vand.u32 %v774, 4294901760
    %984 = vmatpush.msra.mxu0 %v983
    %v985 = vand.u32 %v773, 4294901760
    %986 = vmatpush.msra.mxu0 %v985
    %v987 = vand.u32 %v772, 4294901760
    %988 = vmatpush.msra.mxu0 %v987
    %v989 = vand.u32 %v771, 4294901760
    %990 = vmatpush.msra.mxu0 %v989
    %v991 = vand.u32 %v770, 4294901760
    %992 = vmatpush.msra.mxu0 %v991
    %v993 = vand.u32 %v769, 4294901760
    %994 = vmatpush.msra.mxu0 %v993
    %v995 = vand.u32 %v768, 4294901760
    %996 = vmatpush.msra.mxu0 %v995
    %v997 = vand.u32 %v767, 4294901760
    %998 = vmatpush.msra.mxu0 %v997
    %v999 = vand.u32 %v766, 4294901760
    %1000 = vmatpush.msra.mxu0 %v999
    %v1001 = vand.u32 %v765, 4294901760
    %1002 = vmatpush.msra.mxu0 %v1001
    %v1003 = vand.u32 %v764, 4294901760
    %1004 = vmatpush.msra.mxu0 %v1003
    %v1005 = vand.u32 %v763, 4294901760
    %1006 = vmatpush.msra.mxu0 %v1005
    %v1007 = vand.u32 %v762, 4294901760
    %v1008 = vsub.f32 %v762, %v1007
    %v1009 = vand.u32 %v1008, 4294901760
    %1010 = vmatmul.f32.gmra.mxu0 %v1009
    %v1011 = vpop.f32.mrf.mxu0
    %v1012 = vadd.f32 %v973, %v1011
    %1013 = vdwg.mxu0
    %v1014 = vand.u32 %v778, 4294901760
    %v1015 = vsub.f32 %v778, %v1014
    %v1016 = vand.u32 %v1015, 4294901760
    %1017 = vmatpush.msra.mxu0 %v1016
    %v1018 = vand.u32 %v777, 4294901760
    %v1019 = vsub.f32 %v777, %v1018
    %v1020 = vand.u32 %v1019, 4294901760
    %1021 = vmatpush.msra.mxu0 %v1020
    %v1022 = vand.u32 %v776, 4294901760
    %v1023 = vsub.f32 %v776, %v1022
    %v1024 = vand.u32 %v1023, 4294901760
    %1025 = vmatpush.msra.mxu0 %v1024
    %v1026 = vand.u32 %v775, 4294901760
    %v1027 = vsub.f32 %v775, %v1026
    %v1028 = vand.u32 %v1027, 4294901760
    %1029 = vmatpush.msra.mxu0 %v1028
    %v1030 = vand.u32 %v774, 4294901760
    %v1031 = vsub.f32 %v774, %v1030
    %v1032 = vand.u32 %v1031, 4294901760
    %1033 = vmatpush.msra.mxu0 %v1032
    %v1034 = vand.u32 %v773, 4294901760
    %v1035 = vsub.f32 %v773, %v1034
    %v1036 = vand.u32 %v1035, 4294901760
    %1037 = vmatpush.msra.mxu0 %v1036
    %v1038 = vand.u32 %v772, 4294901760
    %v1039 = vsub.f32 %v772, %v1038
    %v1040 = vand.u32 %v1039, 4294901760
    %1041 = vmatpush.msra.mxu0 %v1040
    %v1042 = vand.u32 %v771, 4294901760
    %v1043 = vsub.f32 %v771, %v1042
    %v1044 = vand.u32 %v1043, 4294901760
    %1045 = vmatpush.msra.mxu0 %v1044
    %v1046 = vand.u32 %v770, 4294901760
    %v1047 = vsub.f32 %v770, %v1046
    %v1048 = vand.u32 %v1047, 4294901760
    %1049 = vmatpush.msra.mxu0 %v1048
    %v1050 = vand.u32 %v769, 4294901760
    %v1051 = vsub.f32 %v769, %v1050
    %v1052 = vand.u32 %v1051, 4294901760
    %1053 = vmatpush.msra.mxu0 %v1052
    %v1054 = vand.u32 %v768, 4294901760
    %v1055 = vsub.f32 %v768, %v1054
    %v1056 = vand.u32 %v1055, 4294901760
    %1057 = vmatpush.msra.mxu0 %v1056
    %v1058 = vand.u32 %v767, 4294901760
    %v1059 = vsub.f32 %v767, %v1058
    %v1060 = vand.u32 %v1059, 4294901760
    %1061 = vmatpush.msra.mxu0 %v1060
    %v1062 = vand.u32 %v766, 4294901760
    %v1063 = vsub.f32 %v766, %v1062
    %v1064 = vand.u32 %v1063, 4294901760
    %1065 = vmatpush.msra.mxu0 %v1064
    %v1066 = vand.u32 %v765, 4294901760
    %v1067 = vsub.f32 %v765, %v1066
    %v1068 = vand.u32 %v1067, 4294901760
    %1069 = vmatpush.msra.mxu0 %v1068
    %v1070 = vand.u32 %v764, 4294901760
    %v1071 = vsub.f32 %v764, %v1070
    %v1072 = vand.u32 %v1071, 4294901760
    %1073 = vmatpush.msra.mxu0 %v1072
    %v1074 = vand.u32 %v763, 4294901760
    %v1075 = vsub.f32 %v763, %v1074
    %v1076 = vand.u32 %v1075, 4294901760
    %1077 = vmatpush.msra.mxu0 %v1076
    %v1078 = vand.u32 %v762, 4294901760
    %1079 = vmatmul.f32.gmra.mxu0 %v1078
    %v1080 = vpop.f32.mrf.mxu0
    %v1081 = vadd.f32 %v1012, %v1080
    %1082 = vdwg.mxu0
    %v1083 = vand.u32 %v778, 4294901760
    %1084 = vmatpush.msra.mxu0 %v1083
    %v1085 = vand.u32 %v777, 4294901760
    %1086 = vmatpush.msra.mxu0 %v1085
    %v1087 = vand.u32 %v776, 4294901760
    %1088 = vmatpush.msra.mxu0 %v1087
    %v1089 = vand.u32 %v775, 4294901760
    %1090 = vmatpush.msra.mxu0 %v1089
    %v1091 = vand.u32 %v774, 4294901760
    %1092 = vmatpush.msra.mxu0 %v1091
    %v1093 = vand.u32 %v773, 4294901760
    %1094 = vmatpush.msra.mxu0 %v1093
    %v1095 = vand.u32 %v772, 4294901760
    %1096 = vmatpush.msra.mxu0 %v1095
    %v1097 = vand.u32 %v771, 4294901760
    %1098 = vmatpush.msra.mxu0 %v1097
    %v1099 = vand.u32 %v770, 4294901760
    %1100 = vmatpush.msra.mxu0 %v1099
    %v1101 = vand.u32 %v769, 4294901760
    %1102 = vmatpush.msra.mxu0 %v1101
    %v1103 = vand.u32 %v768, 4294901760
    %1104 = vmatpush.msra.mxu0 %v1103
    %v1105 = vand.u32 %v767, 4294901760
    %1106 = vmatpush.msra.mxu0 %v1105
    %v1107 = vand.u32 %v766, 4294901760
    %1108 = vmatpush.msra.mxu0 %v1107
    %v1109 = vand.u32 %v765, 4294901760
    %1110 = vmatpush.msra.mxu0 %v1109
    %v1111 = vand.u32 %v764, 4294901760
    %1112 = vmatpush.msra.mxu0 %v1111
    %v1113 = vand.u32 %v763, 4294901760
    %1114 = vmatpush.msra.mxu0 %v1113
    %v1115 = vand.u32 %v762, 4294901760
    %1116 = vmatmul.f32.gmra.mxu0 %v1115
    %v1117 = vpop.f32.mrf.mxu0
    %v1118 = vadd.f32 %v1081, %v1117
    %1119 = vdwg.mxu0
    %vm1120 = vcmask 58368
    %v1121 = vsel %vm1120, %v1118, -inf
    %1122 = vmax.xlane.f32.xlu0 %v1121
    %v1123 = vpop.xlane.xlu0 %1122
    %v1124 = vsub.f32 %v1118, %v1123
    %v1125 = vmul.f32 %v1124, 1.442695
    %v1126 = vpow.pop %v1125
    %v1127 = vsel %vm1120, %v1126, 0.0
    %1128 = vadd.xlane.f32.xlu0 %v1127
    %v1129 = vpop.xlane.xlu0 %1128
    %v1130 = vrcp.pop %v1129
    %v1131 = vmul.f32 %v1129, %v1130
    %v1132 = vsub.f32 2.0, %v1131
    %v1133 = vmul.f32 %v1130, %v1132
    %v1134 = vmul.f32 %v1126, %v1133
    %v1135 = vld [vmem:[%s4] sm:$0xff]
    %v1136 = vld [vmem:[%s4 + $0x8] sm:$0xff]
    %vm1137 = vcmask 64512
    %v1139 = vsel %vm1137, %v1134, 0
    %1141 = vmatpush.msra.mxu0 0.0
    %1142 = vmatpush.msra.mxu0 0.0
    %1143 = vmatpush.msra.mxu0 0.0
    %1144 = vmatpush.msra.mxu0 0.0
    %1145 = vmatpush.msra.mxu0 0.0
    %1146 = vmatpush.msra.mxu0 0.0
    %1147 = vmatpush.msra.mxu0 0.0
    %1148 = vmatpush.msra.mxu0 0.0
    %1149 = vmatpush.msra.mxu0 0.0
    %1150 = vmatpush.msra.mxu0 0.0
    %1151 = vmatpush.msra.mxu0 0.0
    %1152 = vmatpush.msra.mxu0 0.0
    %1153 = vmatpush.msra.mxu0 0.0
    %1154 = vmatpush.msra.mxu0 0.0
    %1155 = vmatpush.msra.mxu0 0.0
    %v1156 = vand.u32 %v1135, 4294901760
    %1157 = vmatpush.msra.mxu0 %v1156
    %v1158 = vand.u32 %v1139, 4294901760
    %v1159 = vsub.f32 %v1139, %v1158
    %v1160 = vand.u32 %v1159, 4294901760
    %v1161 = vsub.f32 %v1159, %v1160
    %v1162 = vand.u32 %v1161, 4294901760
    %1163 = vmatmul.f32.gmra.mxu0 %v1162
    %v1164 = vpop.f32.mrf.mxu0
    %v1165 = vadd.f32 0.0, %v1164
    %1166 = vdwg.mxu0
    %1167 = vmatpush.msra.mxu0 0.0
    %1168 = vmatpush.msra.mxu0 0.0
    %1169 = vmatpush.msra.mxu0 0.0
    %1170 = vmatpush.msra.mxu0 0.0
    %1171 = vmatpush.msra.mxu0 0.0
    %1172 = vmatpush.msra.mxu0 0.0
    %1173 = vmatpush.msra.mxu0 0.0
    %1174 = vmatpush.msra.mxu0 0.0
    %1175 = vmatpush.msra.mxu0 0.0
    %1176 = vmatpush.msra.mxu0 0.0
    %1177 = vmatpush.msra.mxu0 0.0
    %1178 = vmatpush.msra.mxu0 0.0
    %1179 = vmatpush.msra.mxu0 0.0
    %1180 = vmatpush.msra.mxu0 0.0
    %1181 = vmatpush.msra.mxu0 0.0
    %v1182 = vand.u32 %v1135, 4294901760
    %v1183 = vsub.f32 %v1135, %v1182
    %v1184 = vand.u32 %v1183, 4294901760
    %v1185 = vsub.f32 %v1183, %v1184
    %v1186 = vand.u32 %v1185, 4294901760
    %1187 = vmatpush.msra.mxu0 %v1186
    %v1188 = vand.u32 %v1139, 4294901760
    %1189 = vmatmul.f32.gmra.mxu0 %v1188
    %v1190 = vpop.f32.mrf.mxu0
    %v1191 = vadd.f32 %v1165, %v1190
    %1192 = vdwg.mxu0
    %1193 = vmatpush.msra.mxu0 0.0
    %1194 = vmatpush.msra.mxu0 0.0
    %1195 = vmatpush.msra.mxu0 0.0
    %1196 = vmatpush.msra.mxu0 0.0
    %1197 = vmatpush.msra.mxu0 0.0
    %1198 = vmatpush.msra.mxu0 0.0
    %1199 = vmatpush.msra.mxu0 0.0
    %1200 = vmatpush.msra.mxu0 0.0
    %1201 = vmatpush.msra.mxu0 0.0
    %1202 = vmatpush.msra.mxu0 0.0
    %1203 = vmatpush.msra.mxu0 0.0
    %1204 = vmatpush.msra.mxu0 0.0
    %1205 = vmatpush.msra.mxu0 0.0
    %1206 = vmatpush.msra.mxu0 0.0
    %1207 = vmatpush.msra.mxu0 0.0
    %v1208 = vand.u32 %v1135, 4294901760
    %v1209 = vsub.f32 %v1135, %v1208
    %1210 = vmatpush.msra.mxu0 %v1209
    %v1211 = vand.u32 %v1139, 4294901760
    %v1212 = vsub.f32 %v1139, %v1211
    %1213 = vmatmul.f32.gmra.mxu0 %v1212
    %v1214 = vpop.f32.mrf.mxu0
    %v1215 = vadd.f32 %v1191, %v1214
    %1216 = vdwg.mxu0
    %1217 = vmatpush.msra.mxu0 0.0
    %1218 = vmatpush.msra.mxu0 0.0
    %1219 = vmatpush.msra.mxu0 0.0
    %1220 = vmatpush.msra.mxu0 0.0
    %1221 = vmatpush.msra.mxu0 0.0
    %1222 = vmatpush.msra.mxu0 0.0
    %1223 = vmatpush.msra.mxu0 0.0
    %1224 = vmatpush.msra.mxu0 0.0
    %1225 = vmatpush.msra.mxu0 0.0
    %1226 = vmatpush.msra.mxu0 0.0
    %1227 = vmatpush.msra.mxu0 0.0
    %1228 = vmatpush.msra.mxu0 0.0
    %1229 = vmatpush.msra.mxu0 0.0
    %1230 = vmatpush.msra.mxu0 0.0
    %1231 = vmatpush.msra.mxu0 0.0
    %v1232 = vand.u32 %v1135, 4294901760
    %1233 = vmatpush.msra.mxu0 %v1232
    %v1234 = vand.u32 %v1139, 4294901760
    %v1235 = vsub.f32 %v1139, %v1234
    %v1236 = vand.u32 %v1235, 4294901760
    %1237 = vmatmul.f32.gmra.mxu0 %v1236
    %v1238 = vpop.f32.mrf.mxu0
    %v1239 = vadd.f32 %v1215, %v1238
    %1240 = vdwg.mxu0
    %1241 = vmatpush.msra.mxu0 0.0
    %1242 = vmatpush.msra.mxu0 0.0
    %1243 = vmatpush.msra.mxu0 0.0
    %1244 = vmatpush.msra.mxu0 0.0
    %1245 = vmatpush.msra.mxu0 0.0
    %1246 = vmatpush.msra.mxu0 0.0
    %1247 = vmatpush.msra.mxu0 0.0
    %1248 = vmatpush.msra.mxu0 0.0
    %1249 = vmatpush.msra.mxu0 0.0
    %1250 = vmatpush.msra.mxu0 0.0
    %1251 = vmatpush.msra.mxu0 0.0
    %1252 = vmatpush.msra.mxu0 0.0
    %1253 = vmatpush.msra.mxu0 0.0
    %1254 = vmatpush.msra.mxu0 0.0
    %1255 = vmatpush.msra.mxu0 0.0
    %v1256 = vand.u32 %v1135, 4294901760
    %v1257 = vsub.f32 %v1135, %v1256
    %v1258 = vand.u32 %v1257, 4294901760
    %1259 = vmatpush.msra.mxu0 %v1258
    %v1260 = vand.u32 %v1139, 4294901760
    %1261 = vmatmul.f32.gmra.mxu0 %v1260
    %v1262 = vpop.f32.mrf.mxu0
    %v1263 = vadd.f32 %v1239, %v1262
    %1264 = vdwg.mxu0
    %1265 = vmatpush.msra.mxu0 0.0
    %1266 = vmatpush.msra.mxu0 0.0
    %1267 = vmatpush.msra.mxu0 0.0
    %1268 = vmatpush.msra.mxu0 0.0
    %1269 = vmatpush.msra.mxu0 0.0
    %1270 = vmatpush.msra.mxu0 0.0
    %1271 = vmatpush.msra.mxu0 0.0
    %1272 = vmatpush.msra.mxu0 0.0
    %1273 = vmatpush.msra.mxu0 0.0
    %1274 = vmatpush.msra.mxu0 0.0
    %1275 = vmatpush.msra.mxu0 0.0
    %1276 = vmatpush.msra.mxu0 0.0
    %1277 = vmatpush.msra.mxu0 0.0
    %1278 = vmatpush.msra.mxu0 0.0
    %1279 = vmatpush.msra.mxu0 0.0
    %v1280 = vand.u32 %v1135, 4294901760
    %1281 = vmatpush.msra.mxu0 %v1280
    %v1282 = vand.u32 %v1139, 4294901760
    %1283 = vmatmul.f32.gmra.mxu0 %v1282
    %v1284 = vpop.f32.mrf.mxu0
    %v1285 = vadd.f32 %v1263, %v1284
    %1286 = vdwg.mxu0
    %1287 = vmatpush.msra.mxu0 0.0
    %1288 = vmatpush.msra.mxu0 0.0
    %1289 = vmatpush.msra.mxu0 0.0
    %1290 = vmatpush.msra.mxu0 0.0
    %1291 = vmatpush.msra.mxu0 0.0
    %1292 = vmatpush.msra.mxu0 0.0
    %1293 = vmatpush.msra.mxu0 0.0
    %1294 = vmatpush.msra.mxu0 0.0
    %1295 = vmatpush.msra.mxu0 0.0
    %1296 = vmatpush.msra.mxu0 0.0
    %1297 = vmatpush.msra.mxu0 0.0
    %1298 = vmatpush.msra.mxu0 0.0
    %1299 = vmatpush.msra.mxu0 0.0
    %1300 = vmatpush.msra.mxu0 0.0
    %1301 = vmatpush.msra.mxu0 0.0
    %v1302 = vand.u32 %v1136, 4294901760
    %1303 = vmatpush.msra.mxu0 %v1302
    %v1304 = vand.u32 %v1139, 4294901760
    %v1305 = vsub.f32 %v1139, %v1304
    %v1306 = vand.u32 %v1305, 4294901760
    %v1307 = vsub.f32 %v1305, %v1306
    %v1308 = vand.u32 %v1307, 4294901760
    %1309 = vmatmul.f32.gmra.mxu0 %v1308
    %v1310 = vpop.f32.mrf.mxu0
    %v1311 = vadd.f32 0.0, %v1310
    %1312 = vdwg.mxu0
    %1313 = vmatpush.msra.mxu0 0.0
    %1314 = vmatpush.msra.mxu0 0.0
    %1315 = vmatpush.msra.mxu0 0.0
    %1316 = vmatpush.msra.mxu0 0.0
    %1317 = vmatpush.msra.mxu0 0.0
    %1318 = vmatpush.msra.mxu0 0.0
    %1319 = vmatpush.msra.mxu0 0.0
    %1320 = vmatpush.msra.mxu0 0.0
    %1321 = vmatpush.msra.mxu0 0.0
    %1322 = vmatpush.msra.mxu0 0.0
    %1323 = vmatpush.msra.mxu0 0.0
    %1324 = vmatpush.msra.mxu0 0.0
    %1325 = vmatpush.msra.mxu0 0.0
    %1326 = vmatpush.msra.mxu0 0.0
    %1327 = vmatpush.msra.mxu0 0.0
    %v1328 = vand.u32 %v1136, 4294901760
    %v1329 = vsub.f32 %v1136, %v1328
    %v1330 = vand.u32 %v1329, 4294901760
    %v1331 = vsub.f32 %v1329, %v1330
    %v1332 = vand.u32 %v1331, 4294901760
    %1333 = vmatpush.msra.mxu0 %v1332
    %v1334 = vand.u32 %v1139, 4294901760
    %1335 = vmatmul.f32.gmra.mxu0 %v1334
    %v1336 = vpop.f32.mrf.mxu0
    %v1337 = vadd.f32 %v1311, %v1336
    %1338 = vdwg.mxu0
    %1339 = vmatpush.msra.mxu0 0.0
    %1340 = vmatpush.msra.mxu0 0.0
    %1341 = vmatpush.msra.mxu0 0.0
    %1342 = vmatpush.msra.mxu0 0.0
    %1343 = vmatpush.msra.mxu0 0.0
    %1344 = vmatpush.msra.mxu0 0.0
    %1345 = vmatpush.msra.mxu0 0.0
    %1346 = vmatpush.msra.mxu0 0.0
    %1347 = vmatpush.msra.mxu0 0.0
    %1348 = vmatpush.msra.mxu0 0.0
    %1349 = vmatpush.msra.mxu0 0.0
    %1350 = vmatpush.msra.mxu0 0.0
    %1351 = vmatpush.msra.mxu0 0.0
    %1352 = vmatpush.msra.mxu0 0.0
    %1353 = vmatpush.msra.mxu0 0.0
    %v1354 = vand.u32 %v1136, 4294901760
    %v1355 = vsub.f32 %v1136, %v1354
    %1356 = vmatpush.msra.mxu0 %v1355
    %v1357 = vand.u32 %v1139, 4294901760
    %v1358 = vsub.f32 %v1139, %v1357
    %1359 = vmatmul.f32.gmra.mxu0 %v1358
    %v1360 = vpop.f32.mrf.mxu0
    %v1361 = vadd.f32 %v1337, %v1360
    %1362 = vdwg.mxu0
    %1363 = vmatpush.msra.mxu0 0.0
    %1364 = vmatpush.msra.mxu0 0.0
    %1365 = vmatpush.msra.mxu0 0.0
    %1366 = vmatpush.msra.mxu0 0.0
    %1367 = vmatpush.msra.mxu0 0.0
    %1368 = vmatpush.msra.mxu0 0.0
    %1369 = vmatpush.msra.mxu0 0.0
    %1370 = vmatpush.msra.mxu0 0.0
    %1371 = vmatpush.msra.mxu0 0.0
    %1372 = vmatpush.msra.mxu0 0.0
    %1373 = vmatpush.msra.mxu0 0.0
    %1374 = vmatpush.msra.mxu0 0.0
    %1375 = vmatpush.msra.mxu0 0.0
    %1376 = vmatpush.msra.mxu0 0.0
    %1377 = vmatpush.msra.mxu0 0.0
    %v1378 = vand.u32 %v1136, 4294901760
    %1379 = vmatpush.msra.mxu0 %v1378
    %v1380 = vand.u32 %v1139, 4294901760
    %v1381 = vsub.f32 %v1139, %v1380
    %v1382 = vand.u32 %v1381, 4294901760
    %1383 = vmatmul.f32.gmra.mxu0 %v1382
    %v1384 = vpop.f32.mrf.mxu0
    %v1385 = vadd.f32 %v1361, %v1384
    %1386 = vdwg.mxu0
    %1387 = vmatpush.msra.mxu0 0.0
    %1388 = vmatpush.msra.mxu0 0.0
    %1389 = vmatpush.msra.mxu0 0.0
    %1390 = vmatpush.msra.mxu0 0.0
    %1391 = vmatpush.msra.mxu0 0.0
    %1392 = vmatpush.msra.mxu0 0.0
    %1393 = vmatpush.msra.mxu0 0.0
    %1394 = vmatpush.msra.mxu0 0.0
    %1395 = vmatpush.msra.mxu0 0.0
    %1396 = vmatpush.msra.mxu0 0.0
    %1397 = vmatpush.msra.mxu0 0.0
    %1398 = vmatpush.msra.mxu0 0.0
    %1399 = vmatpush.msra.mxu0 0.0
    %1400 = vmatpush.msra.mxu0 0.0
    %1401 = vmatpush.msra.mxu0 0.0
    %v1402 = vand.u32 %v1136, 4294901760
    %v1403 = vsub.f32 %v1136, %v1402
    %v1404 = vand.u32 %v1403, 4294901760
    %1405 = vmatpush.msra.mxu0 %v1404
    %v1406 = vand.u32 %v1139, 4294901760
    %1407 = vmatmul.f32.gmra.mxu0 %v1406
    %v1408 = vpop.f32.mrf.mxu0
    %v1409 = vadd.f32 %v1385, %v1408
    %1410 = vdwg.mxu0
    %1411 = vmatpush.msra.mxu0 0.0
    %1412 = vmatpush.msra.mxu0 0.0
    %1413 = vmatpush.msra.mxu0 0.0
    %1414 = vmatpush.msra.mxu0 0.0
    %1415 = vmatpush.msra.mxu0 0.0
    %1416 = vmatpush.msra.mxu0 0.0
    %1417 = vmatpush.msra.mxu0 0.0
    %1418 = vmatpush.msra.mxu0 0.0
    %1419 = vmatpush.msra.mxu0 0.0
    %1420 = vmatpush.msra.mxu0 0.0
    %1421 = vmatpush.msra.mxu0 0.0
    %1422 = vmatpush.msra.mxu0 0.0
    %1423 = vmatpush.msra.mxu0 0.0
    %1424 = vmatpush.msra.mxu0 0.0
    %1425 = vmatpush.msra.mxu0 0.0
    %v1426 = vand.u32 %v1136, 4294901760
    %1427 = vmatpush.msra.mxu0 %v1426
    %v1428 = vand.u32 %v1139, 4294901760
    %1429 = vmatmul.f32.gmra.mxu0 %v1428
    %v1430 = vpop.f32.mrf.mxu0
    %v1431 = vadd.f32 %v1409, %v1430
    %1432 = vdwg.mxu0
    %v1435 = vrot.slane %v1431, 6
    %vm1436 = vcmask 1041408
    %v1437 = vsel %vm1436, %v1285, %v1435
    %v1439 = vmul.f32 %v37, %v1437
    %1440 = vst [vmem:[#allocation5] sm:$0xf] %v1439
    // Predicated region
    $region26: #{tpu_custom_call.1} parent=1 // pred_check
      _
    $region27: #{tpu_custom_call.1} parent=1 // pred_check_branch
      %1442 = sbr.rel (0) target = $region29
    $region28: #{tpu_custom_call.1} parent=1 // pred_region
      %1444 = vsyncadd [#allocation4], 0
      %s1446 = sshll.u32 [#allocation5], 4
      %s1447 = int_to_ptr.vmem [resolvable:$true] %s1446
      %s1448 = sshll.u32 %s5, 4
      %s1449 = int_to_ptr.hbm [resolvable:$true] %s1448
      %1451 = dma.vmem_to_hbm [thread:$0]  %s1447, 64, %s1449, [#allocation4]
    $region29: #{tpu_custom_call.1} parent=1 // pred_fallthru
      _
    // Predicated region
    $region30: #{tpu_custom_call.1} parent=1 // pred_check
      _
    $region31: #{tpu_custom_call.1} parent=1 // pred_check_branch
      %1453 = sbr.rel (0) target = $region33
    $region32: #{tpu_custom_call.1} parent=1 // pred_region
      %1455 = dma.done [#allocation4], 64
    $region33: #{tpu_custom_call.1} parent=1 // pred_fallthru
      _
    %1456 = vsyncpa [#allocation3], 1
    %1457 = vsyncpa [#allocation4], 1

</llo_original>
